<compile_context>
chip_gen: v5e
topology: v5e:2x2
jax: 0.10.0
libtpu: 0.0.40
codegen_flags: <defaults>
</compile_context>

<pallas_src>
import functools

import jax
import jax.numpy as jnp
from jax.experimental import pallas as pl
from jax.experimental.pallas import tpu as pltpu

EPS = 1e-5
BF16 = jnp.bfloat16


def _layernorm(z, w, b):
    # z: (N, D) f32, w/b: (1, D) f32 — stats kept in f32.
    mean = jnp.mean(z, axis=-1, keepdims=True)
    zc = z - mean
    var = jnp.mean(zc * zc, axis=-1, keepdims=True)
    return zc * jax.lax.rsqrt(var + EPS) * w + b


def _gelu_exact(x):
    # nn.GELU default = exact erf.  erf via the Abramowitz–Stegun 7.1.26
    # rational approximation (|err| < 1.5e-7): only exp / mul / add / where,
    # which always lower on Mosaic (no reliance on an erf primitive rule).
    # jax.nn.gelu(approximate=True) would be cheaper (tanh -> EUP slot) but
    # deviates slightly from nn.GELU's exact-erf numerics, so it is not used.
    z = x * 0.7071067811865476          # x / sqrt(2)
    a = jnp.abs(z)
    t = 1.0 / (1.0 + 0.3275911 * a)
    poly = t * (0.254829592 + t * (-0.284496736 + t * (1.421413741
               + t * (-1.453152027 + t * 1.061405429))))
    erf_abs = 1.0 - poly * jnp.exp(-a * a)
    erf_z = jnp.where(z >= 0.0, erf_abs, -erf_abs)
    return 0.5 * x * (1.0 + erf_z)


def _block_kernel(
    num_heads,
    x_ref,
    wqkv_ref, wo_ref, bo_ref,
    ln1w_ref, ln1b_ref,
    fc1w_ref, fc1b_ref, fc2w_ref, fc2b_ref,
    ln2w_ref, ln2b_ref,
    adlnw_ref, adlnb_ref, adwd_ref, adbd_ref, adwu_ref, adbu_ref,
    o_ref,
):
    x = x_ref[...]                                 # (N, D) f32 residual stream
    N, D = x.shape
    H = num_heads
    hd = D // H

    # ------------------ attention: x1 = x + proj(attn(LN1(x))) -------------
    xn = _layernorm(x, ln1w_ref[...], ln1b_ref[...]).astype(BF16)

    # ONE fused lane-dense (N,D)x(D,3D) bf16 matmul, f32 accumulation.
    # Attention scale is folded into the q columns of wqkv in the wrapper.
    qkv = jnp.dot(xn, wqkv_ref[...],
                  preferred_element_type=jnp.float32)          # (N, 3D) f32

    # Per-head score / PV matmuls on static 2-D views of the fused output.
    ctx_heads = []
    for h in range(H):
        lo = h * hd
        qh = qkv[:, lo:lo + hd].astype(BF16)                   # (N, hd)
        kh = qkv[:, D + lo:D + lo + hd].astype(BF16)           # (N, hd)
        vh = qkv[:, 2 * D + lo:2 * D + lo + hd].astype(BF16)   # (N, hd)

        s = jnp.einsum('qd,kd->qk', qh, kh,
                       preferred_element_type=jnp.float32)     # (N, N) f32
        # Single live f32 score buffer: exp in place, bf16 right after the sum.
        s = jnp.exp(s - jnp.max(s, axis=-1, keepdims=True))
        p = (s * pl.reciprocal(jnp.sum(s, axis=-1, keepdims=True),
                               approx=True)).astype(BF16)
        ctx_heads.append(jnp.dot(p, vh,
                                 preferred_element_type=jnp.float32))  # (N, hd)

    # Merge heads on the lane axis; ONE full-K (N,D)x(D,D) output projection.
    ctx = jnp.concatenate(ctx_heads, axis=-1).astype(BF16)     # (N, D)
    attn_out = jnp.dot(ctx, wo_ref[...],
                       preferred_element_type=jnp.float32) + bo_ref[...]
    x1 = x + attn_out                                          # residual 1

    # ------------- adapter branch (adaptmlp, add_residual=False) -----------
    # AdaptFormer Adapter: LN('in') -> down -> ReLU -> (dropout=id) -> up, scale=1.
    za = _layernorm(x1, adlnw_ref[...], adlnb_ref[...]).astype(BF16)
    dwn = jnp.dot(za, adwd_ref[...],
                  preferred_element_type=jnp.float32) + adbd_ref[...]
    dwn = jnp.maximum(dwn, 0.0).astype(BF16)                   # ReLU
    adapt = jnp.dot(dwn, adwu_ref[...],
                    preferred_element_type=jnp.float32) + adbu_ref[...]

    # ------------------ MLP: x = x1 + fc2(gelu(fc1(LN2(x1)))) --------------
    x2n = _layernorm(x1, ln2w_ref[...], ln2b_ref[...]).astype(BF16)
    hmid = jnp.dot(x2n, fc1w_ref[...],
                   preferred_element_type=jnp.float32) + fc1b_ref[...]
    hmid = _gelu_exact(hmid).astype(BF16)                      # exact-erf GELU
    m = jnp.dot(hmid, fc2w_ref[...],
                preferred_element_type=jnp.float32) + fc2b_ref[...]

    o_ref[...] = (x1 + m + adapt).astype(o_ref.dtype)


def adapter_block(x, params, *, num_heads):
    B, N, D = x.shape
    H = num_heads
    hd = D // H
    scale = hd ** -0.5

    qkv_w = params["qkv_w"]          # (D, 3D), columns [q | k | v], heads contiguous

    # Wrapper-side layout plumbing + bf16 cast of all matmul weights.
    # Attention scale folded into the q columns of the fused qkv weight.
    wqkv = jnp.concatenate([qkv_w[:, :D] * scale, qkv_w[:, D:]],
                           axis=1).astype(BF16)                # (D, 3D)
    wo = params["proj_w"].astype(BF16)                         # (D, D), full-K proj

    weights = (
        wqkv, wo, params["proj_b"],
        params["norm1_w"], params["norm1_b"],
        params["fc1_w"].astype(BF16), params["fc1_b"],
        params["fc2_w"].astype(BF16), params["fc2_b"],
        params["norm2_w"], params["norm2_b"],
        params["ad_ln_w"], params["ad_ln_b"],
        params["ad_down_w"].astype(BF16), params["ad_down_b"],
        params["ad_up_w"].astype(BF16), params["ad_up_b"],
    )

    # Untiled VMEM residency for all weights: single-buffered by construction
    # (no block_shape / index_map -> no per-grid-step double buffering).
    weight_spec = pl.BlockSpec(memory_space=pltpu.MemorySpace.VMEM)

    # Scoped-VMEM budget: weights + double-buffered x/out tiles + in-kernel
    # intermediates.  Generation-aware clamp: leave ~12 MiB headroom below the
    # physical per-core VMEM (64 MiB on v7x, 128 MiB on v5e/v6e) instead of a
    # hard 64 MiB ceiling.
    hidden = params["fc1_w"].shape[1]
    bott = params["ad_down_w"].shape[1]
    weight_bytes = sum(int(w.size) * w.dtype.itemsize for w in weights)
    act_bytes = 4 * (3 * N * D          # fused qkv output (f32)
                     + 2 * N * N        # live per-head score buffers (f32)
                     + N * hidden       # MLP hidden (f32)
                     + N * bott         # adapter bottleneck (f32)
                     + 6 * N * D)       # residuals / LN temps / merged ctx
    act_bytes += 2 * (N * N + 4 * N * D + N * hidden)   # bf16 copies
    io_bytes = 2 * 2 * N * D * 4        # double-buffered (N, D) in + out tiles
    est = weight_bytes + act_bytes + io_bytes
    try:
        vmem_cap = int(pltpu.get_tpu_info().vmem_capacity_bytes)
    except Exception:
        vmem_cap = 64 << 20             # conservative fallback (v7x-sized)
    vmem_limit = int(min(vmem_cap - (12 << 20), max(32 << 20, int(1.25 * est))))
    vmem_limit = max(vmem_limit, 16 << 20)

    return pl.pallas_call(
        functools.partial(_block_kernel, H),
        out_shape=jax.ShapeDtypeStruct((B, N, D), x.dtype),
        grid_spec=pltpu.PrefetchScalarGridSpec(
            num_scalar_prefetch=0,
            grid=(B,),
            in_specs=[pl.BlockSpec((pl.Squeezed(), N, D), lambda b: (b, 0, 0))]
                     + [weight_spec] * len(weights),
            out_specs=pl.BlockSpec((pl.Squeezed(), N, D), lambda b: (b, 0, 0)),
        ),
        compiler_params=pltpu.CompilerParams(
            dimension_semantics=("parallel",),
            vmem_limit_bytes=vmem_limit,
        ),
    )(x, *weights)


# ---------------- pure-JAX reference (for verification) --------------------
def _reference(x, params, *, num_heads):
    B, N, D = x.shape
    H = num_heads
    hd = D // H
    scale = hd ** -0.5

    def ln(z, w, b):
        m = jnp.mean(z, -1, keepdims=True)
        v = jnp.mean((z - m) ** 2, -1, keepdims=True)
        return (z - m) / jnp.sqrt(v + EPS) * w + b

    # x = x + attn(norm1(x))
    xn = ln(x, params["norm1_w"][0], params["norm1_b"][0])
    qkv = xn @ params["qkv_w"]                                  # (B, N, 3D)
    qkv = qkv.reshape(B, N, 3, H, hd).transpose(2, 0, 3, 1, 4)
    q, k, v = qkv[0] * scale, qkv[1], qkv[2]                    # (B, H, N, hd)
    attn = jax.nn.softmax(jnp.einsum("bhqd,bhkd->bhqk", q, k), axis=-1)
    o = jnp.einsum("bhqk,bhkd->bhqd", attn, v)
    o = o.transpose(0, 2, 1, 3).reshape(B, N, D)
    x = x + (o @ params["proj_w"] + params["proj_b"][0])

    # adapt_x = adaptmlp(x, add_residual=False)
    za = ln(x, params["ad_ln_w"][0], params["ad_ln_b"][0])
    d = jax.nn.relu(za @ params["ad_down_w"] + params["ad_down_b"][0])
    adapt_x = d @ params["ad_up_w"] + params["ad_up_b"][0]      # scale = 1

    # x = x + mlp(norm2(x))
    x2 = ln(x, params["norm2_w"][0], params["norm2_b"][0])
    h = jax.nn.gelu(x2 @ params["fc1_w"] + params["fc1_b"][0], approximate=False)
    x = x + (h @ params["fc2_w"] + params["fc2_b"][0])

    # x = x + adapt_x
    return x + adapt_x


if __name__ == "__main__":
    B, N, D = 2, 8, 32
    num_heads = 4
    hidden = int(D * 4.0)     # mlp_ratio = 4.0
    bottleneck = 16           # adapter bottleneck (128 for d_model=768 in the spec)

    key = jax.random.PRNGKey(0)
    ks = jax.random.split(key, 12)

    # Deterministic synthetic parameters (not a checkpoint; nonzero up_proj so
    # the adapter path is actually exercised).
    params = {
        "qkv_w":  0.05 * jax.random.normal(ks[0], (D, 3 * D), jnp.float32),
        "proj_w": 0.05 * jax.random.normal(ks[1], (D, D), jnp.float32),
        "proj_b": 0.05 * jax.random.normal(ks[2], (1, D), jnp.float32),
        "norm1_w": jnp.ones((1, D), jnp.float32),
        "norm1_b": jnp.zeros((1, D), jnp.float32),
        "fc1_w":  0.05 * jax.random.normal(ks[3], (D, hidden), jnp.float32),
        "fc1_b":  0.05 * jax.random.normal(ks[4], (1, hidden), jnp.float32),
        "fc2_w":  0.05 * jax.random.normal(ks[5], (hidden, D), jnp.float32),
        "fc2_b":  0.05 * jax.random.normal(ks[6], (1, D), jnp.float32),
        "norm2_w": jnp.ones((1, D), jnp.float32),
        "norm2_b": jnp.zeros((1, D), jnp.float32),
        "ad_ln_w": jnp.ones((1, D), jnp.float32),
        "ad_ln_b": jnp.zeros((1, D), jnp.float32),
        "ad_down_w": 0.05 * jax.random.normal(ks[7], (D, bottleneck), jnp.float32),
        "ad_down_b": 0.05 * jax.random.normal(ks[8], (1, bottleneck), jnp.float32),
        "ad_up_w":  0.05 * jax.random.normal(ks[9], (bottleneck, D), jnp.float32),
        "ad_up_b":  0.05 * jax.random.normal(ks[10], (1, D), jnp.float32),
    }

    x = jax.random.normal(ks[11], (B, N, D), jnp.float32)

    out = jax.block_until_ready(adapter_block(x, params, num_heads=num_heads))
    ref = _reference(x, params, num_heads=num_heads)
    err = float(jnp.max(jnp.abs(out - ref)))
    # bf16 matmul operands (f32 accumulation) vs f32 reference -> loose tolerance.
    assert jnp.allclose(out, ref, atol=3e-2, rtol=3e-2), f"max abs err {err}"
    print("KERNEL_OK")
</pallas_src>

<mosaic_0001>
module attributes {stable_mosaic.version = 11 : i64} {
  func.func @_block_kernel(%arg0: i32, %arg1: memref<1x8x32xf32, #tpu.memory_space<vmem>>, %arg2: memref<32x96xbf16, #tpu.memory_space<vmem>>, %arg3: memref<32x32xbf16, #tpu.memory_space<vmem>>, %arg4: memref<1x32xf32, #tpu.memory_space<vmem>>, %arg5: memref<1x32xf32, #tpu.memory_space<vmem>>, %arg6: memref<1x32xf32, #tpu.memory_space<vmem>>, %arg7: memref<32x128xbf16, #tpu.memory_space<vmem>>, %arg8: memref<1x128xf32, #tpu.memory_space<vmem>>, %arg9: memref<128x32xbf16, #tpu.memory_space<vmem>>, %arg10: memref<1x32xf32, #tpu.memory_space<vmem>>, %arg11: memref<1x32xf32, #tpu.memory_space<vmem>>, %arg12: memref<1x32xf32, #tpu.memory_space<vmem>>, %arg13: memref<1x32xf32, #tpu.memory_space<vmem>>, %arg14: memref<1x32xf32, #tpu.memory_space<vmem>>, %arg15: memref<32x16xbf16, #tpu.memory_space<vmem>>, %arg16: memref<1x16xf32, #tpu.memory_space<vmem>>, %arg17: memref<16x32xbf16, #tpu.memory_space<vmem>>, %arg18: memref<1x32xf32, #tpu.memory_space<vmem>>, %arg19: memref<1x8x32xf32, #tpu.memory_space<vmem>>) attributes {dimension_semantics = [#tpu.dimension_semantics<parallel>], iteration_bounds = array<i64: 2>, scalar_prefetch = 0 : i64, scratch_operands = 0 : i64, tpu.core_type = #tpu.core_type<tc>, window_params = [{transform_indices = @transform_0, window_bounds = array<i64: 1, 8, 32>}, {pipeline_mode = #tpu.pipeline_mode<synchronous>, transform_indices = @transform_1, window_bounds = array<i64: 32, 96>}, {pipeline_mode = #tpu.pipeline_mode<synchronous>, transform_indices = @transform_2, window_bounds = array<i64: 32, 32>}, {pipeline_mode = #tpu.pipeline_mode<synchronous>, transform_indices = @transform_3, window_bounds = array<i64: 1, 32>}, {pipeline_mode = #tpu.pipeline_mode<synchronous>, transform_indices = @transform_4, window_bounds = array<i64: 1, 32>}, {pipeline_mode = #tpu.pipeline_mode<synchronous>, transform_indices = @transform_5, window_bounds = array<i64: 1, 32>}, {pipeline_mode = #tpu.pipeline_mode<synchronous>, transform_indices = @transform_6, window_bounds = array<i64: 32, 128>}, {pipeline_mode = #tpu.pipeline_mode<synchronous>, transform_indices = @transform_7, window_bounds = array<i64: 1, 128>}, {pipeline_mode = #tpu.pipeline_mode<synchronous>, transform_indices = @transform_8, window_bounds = array<i64: 128, 32>}, {pipeline_mode = #tpu.pipeline_mode<synchronous>, transform_indices = @transform_9, window_bounds = array<i64: 1, 32>}, {pipeline_mode = #tpu.pipeline_mode<synchronous>, transform_indices = @transform_10, window_bounds = array<i64: 1, 32>}, {pipeline_mode = #tpu.pipeline_mode<synchronous>, transform_indices = @transform_11, window_bounds = array<i64: 1, 32>}, {pipeline_mode = #tpu.pipeline_mode<synchronous>, transform_indices = @transform_12, window_bounds = array<i64: 1, 32>}, {pipeline_mode = #tpu.pipeline_mode<synchronous>, transform_indices = @transform_13, window_bounds = array<i64: 1, 32>}, {pipeline_mode = #tpu.pipeline_mode<synchronous>, transform_indices = @transform_14, window_bounds = array<i64: 32, 16>}, {pipeline_mode = #tpu.pipeline_mode<synchronous>, transform_indices = @transform_15, window_bounds = array<i64: 1, 16>}, {pipeline_mode = #tpu.pipeline_mode<synchronous>, transform_indices = @transform_16, window_bounds = array<i64: 16, 32>}, {pipeline_mode = #tpu.pipeline_mode<synchronous>, transform_indices = @transform_17, window_bounds = array<i64: 1, 32>}, {transform_indices = @transform_18, window_bounds = array<i64: 1, 8, 32>}]} {
    %c0 = arith.constant 0 : index
    %c0_0 = arith.constant 0 : index
    %c0_1 = arith.constant 0 : index
    %0 = vector.load %arg1[%c0, %c0_0, %c0_1] : memref<1x8x32xf32, #tpu.memory_space<vmem>>, vector<1x8x32xf32>
    %1 = vector.shape_cast %0 : vector<1x8x32xf32> to vector<8x32xf32>
    %c0_2 = arith.constant 0 : index
    %c0_3 = arith.constant 0 : index
    %2 = vector.load %arg5[%c0_2, %c0_3] : memref<1x32xf32, #tpu.memory_space<vmem>>, vector<1x32xf32>
    %c0_4 = arith.constant 0 : index
    %c0_5 = arith.constant 0 : index
    %3 = vector.load %arg6[%c0_4, %c0_5] : memref<1x32xf32, #tpu.memory_space<vmem>>, vector<1x32xf32>
    %cst = arith.constant dense<0.000000e+00> : vector<8xf32>
    %4 = vector.multi_reduction <add>, %1, %cst [1] : vector<8x32xf32> to vector<8xf32>
    %5 = vector.shape_cast %4 : vector<8xf32> to vector<8x1xf32>
    %cst_6 = arith.constant 3.200000e+01 : f32
    %6 = vector.broadcast %cst_6 : f32 to vector<8x1xf32>
    %7 = arith.divf %5, %6 : vector<8x1xf32>
    %8 = vector.broadcast %7 : vector<8x1xf32> to vector<8x32xf32>
    %9 = arith.subf %1, %8 : vector<8x32xf32>
    %10 = arith.mulf %9, %9 : vector<8x32xf32>
    %cst_7 = arith.constant dense<0.000000e+00> : vector<8xf32>
    %11 = vector.multi_reduction <add>, %10, %cst_7 [1] : vector<8x32xf32> to vector<8xf32>
    %12 = vector.shape_cast %11 : vector<8xf32> to vector<8x1xf32>
    %cst_8 = arith.constant 3.200000e+01 : f32
    %13 = vector.broadcast %cst_8 : f32 to vector<8x1xf32>
    %14 = arith.divf %12, %13 : vector<8x1xf32>
    %cst_9 = arith.constant 9.99999974E-6 : f32
    %15 = vector.broadcast %cst_9 : f32 to vector<8x1xf32>
    %16 = arith.addf %14, %15 : vector<8x1xf32>
    %17 = math.rsqrt %16 : vector<8x1xf32>
    %18 = vector.broadcast %17 : vector<8x1xf32> to vector<8x32xf32>
    %19 = arith.mulf %9, %18 : vector<8x32xf32>
    %20 = vector.broadcast %2 : vector<1x32xf32> to vector<8x32xf32>
    %21 = arith.mulf %19, %20 : vector<8x32xf32>
    %22 = vector.broadcast %3 : vector<1x32xf32> to vector<8x32xf32>
    %23 = arith.addf %21, %22 : vector<8x32xf32>
    %24 = arith.truncf %23 : vector<8x32xf32> to vector<8x32xbf16>
    %c0_10 = arith.constant 0 : index
    %c0_11 = arith.constant 0 : index
    %25 = vector.load %arg2[%c0_10, %c0_11] : memref<32x96xbf16, #tpu.memory_space<vmem>>, vector<32x96xbf16>
    %cst_12 = arith.constant dense<0.000000e+00> : vector<8x96xf32>
    %26 = tpu.matmul %24, %25, %cst_12 {dimension_numbers = #tpu.dot_dimension_numbers<[1], [0], [0], [1], [0, 0, 1, 1], [], []>} : vector<8x32xbf16>, vector<32x96xbf16>, vector<8x96xf32> -> vector<8x96xf32>
    %27 = vector.extract_strided_slice %26 {offsets = [0, 0], sizes = [8, 8], strides = [1, 1]} : vector<8x96xf32> to vector<8x8xf32>
    %28 = arith.truncf %27 : vector<8x8xf32> to vector<8x8xbf16>
    %29 = vector.extract_strided_slice %26 {offsets = [0, 32], sizes = [8, 8], strides = [1, 1]} : vector<8x96xf32> to vector<8x8xf32>
    %30 = arith.truncf %29 : vector<8x8xf32> to vector<8x8xbf16>
    %31 = vector.extract_strided_slice %26 {offsets = [0, 64], sizes = [8, 8], strides = [1, 1]} : vector<8x96xf32> to vector<8x8xf32>
    %32 = arith.truncf %31 : vector<8x8xf32> to vector<8x8xbf16>
    "tpu.trace_start"() <{level = 10 : i32, message = "qd,kd->qk"}> : () -> ()
    %cst_13 = arith.constant dense<0.000000e+00> : vector<8x8xf32>
    %33 = tpu.matmul %28, %30, %cst_13 {dimension_numbers = #tpu.dot_dimension_numbers<[1], [1], [0], [0], [0, 0, 1, 0], [], []>} : vector<8x8xbf16>, vector<8x8xbf16>, vector<8x8xf32> -> vector<8x8xf32>
    "tpu.trace_stop"() : () -> ()
    %cst_14 = arith.constant dense<0xFF800000> : vector<8xf32>
    %34 = vector.multi_reduction <maximumf>, %33, %cst_14 [1] : vector<8x8xf32> to vector<8xf32>
    %35 = vector.shape_cast %34 : vector<8xf32> to vector<8x1xf32>
    %36 = vector.broadcast %35 : vector<8x1xf32> to vector<8x8xf32>
    %37 = arith.subf %33, %36 : vector<8x8xf32>
    %38 = math.exp %37 : vector<8x8xf32>
    %cst_15 = arith.constant dense<0.000000e+00> : vector<8xf32>
    %39 = vector.multi_reduction <add>, %38, %cst_15 [1] : vector<8x8xf32> to vector<8xf32>
    %40 = vector.shape_cast %39 : vector<8xf32> to vector<8x1xf32>
    %41 = tpu.reciprocal %40 {approx = true} : vector<8x1xf32> -> vector<8x1xf32>
    %42 = vector.broadcast %41 : vector<8x1xf32> to vector<8x8xf32>
    %43 = arith.mulf %38, %42 : vector<8x8xf32>
    %44 = arith.truncf %43 : vector<8x8xf32> to vector<8x8xbf16>
    %cst_16 = arith.constant dense<0.000000e+00> : vector<8x8xf32>
    %45 = tpu.matmul %44, %32, %cst_16 {dimension_numbers = #tpu.dot_dimension_numbers<[1], [0], [0], [1], [0, 0, 1, 1], [], []>} : vector<8x8xbf16>, vector<8x8xbf16>, vector<8x8xf32> -> vector<8x8xf32>
    %46 = vector.extract_strided_slice %26 {offsets = [0, 8], sizes = [8, 8], strides = [1, 1]} : vector<8x96xf32> to vector<8x8xf32>
    %47 = arith.truncf %46 : vector<8x8xf32> to vector<8x8xbf16>
    %48 = vector.extract_strided_slice %26 {offsets = [0, 40], sizes = [8, 8], strides = [1, 1]} : vector<8x96xf32> to vector<8x8xf32>
    %49 = arith.truncf %48 : vector<8x8xf32> to vector<8x8xbf16>
    %50 = vector.extract_strided_slice %26 {offsets = [0, 72], sizes = [8, 8], strides = [1, 1]} : vector<8x96xf32> to vector<8x8xf32>
    %51 = arith.truncf %50 : vector<8x8xf32> to vector<8x8xbf16>
    "tpu.trace_start"() <{level = 10 : i32, message = "qd,kd->qk"}> : () -> ()
    %cst_17 = arith.constant dense<0.000000e+00> : vector<8x8xf32>
    %52 = tpu.matmul %47, %49, %cst_17 {dimension_numbers = #tpu.dot_dimension_numbers<[1], [1], [0], [0], [0, 0, 1, 0], [], []>} : vector<8x8xbf16>, vector<8x8xbf16>, vector<8x8xf32> -> vector<8x8xf32>
    "tpu.trace_stop"() : () -> ()
    %cst_18 = arith.constant dense<0xFF800000> : vector<8xf32>
    %53 = vector.multi_reduction <maximumf>, %52, %cst_18 [1] : vector<8x8xf32> to vector<8xf32>
    %54 = vector.shape_cast %53 : vector<8xf32> to vector<8x1xf32>
    %55 = vector.broadcast %54 : vector<8x1xf32> to vector<8x8xf32>
    %56 = arith.subf %52, %55 : vector<8x8xf32>
    %57 = math.exp %56 : vector<8x8xf32>
    %cst_19 = arith.constant dense<0.000000e+00> : vector<8xf32>
    %58 = vector.multi_reduction <add>, %57, %cst_19 [1] : vector<8x8xf32> to vector<8xf32>
    %59 = vector.shape_cast %58 : vector<8xf32> to vector<8x1xf32>
    %60 = tpu.reciprocal %59 {approx = true} : vector<8x1xf32> -> vector<8x1xf32>
    %61 = vector.broadcast %60 : vector<8x1xf32> to vector<8x8xf32>
    %62 = arith.mulf %57, %61 : vector<8x8xf32>
    %63 = arith.truncf %62 : vector<8x8xf32> to vector<8x8xbf16>
    %cst_20 = arith.constant dense<0.000000e+00> : vector<8x8xf32>
    %64 = tpu.matmul %63, %51, %cst_20 {dimension_numbers = #tpu.dot_dimension_numbers<[1], [0], [0], [1], [0, 0, 1, 1], [], []>} : vector<8x8xbf16>, vector<8x8xbf16>, vector<8x8xf32> -> vector<8x8xf32>
    %65 = vector.extract_strided_slice %26 {offsets = [0, 16], sizes = [8, 8], strides = [1, 1]} : vector<8x96xf32> to vector<8x8xf32>
    %66 = arith.truncf %65 : vector<8x8xf32> to vector<8x8xbf16>
    %67 = vector.extract_strided_slice %26 {offsets = [0, 48], sizes = [8, 8], strides = [1, 1]} : vector<8x96xf32> to vector<8x8xf32>
    %68 = arith.truncf %67 : vector<8x8xf32> to vector<8x8xbf16>
    %69 = vector.extract_strided_slice %26 {offsets = [0, 80], sizes = [8, 8], strides = [1, 1]} : vector<8x96xf32> to vector<8x8xf32>
    %70 = arith.truncf %69 : vector<8x8xf32> to vector<8x8xbf16>
    "tpu.trace_start"() <{level = 10 : i32, message = "qd,kd->qk"}> : () -> ()
    %cst_21 = arith.constant dense<0.000000e+00> : vector<8x8xf32>
    %71 = tpu.matmul %66, %68, %cst_21 {dimension_numbers = #tpu.dot_dimension_numbers<[1], [1], [0], [0], [0, 0, 1, 0], [], []>} : vector<8x8xbf16>, vector<8x8xbf16>, vector<8x8xf32> -> vector<8x8xf32>
    "tpu.trace_stop"() : () -> ()
    %cst_22 = arith.constant dense<0xFF800000> : vector<8xf32>
    %72 = vector.multi_reduction <maximumf>, %71, %cst_22 [1] : vector<8x8xf32> to vector<8xf32>
    %73 = vector.shape_cast %72 : vector<8xf32> to vector<8x1xf32>
    %74 = vector.broadcast %73 : vector<8x1xf32> to vector<8x8xf32>
    %75 = arith.subf %71, %74 : vector<8x8xf32>
    %76 = math.exp %75 : vector<8x8xf32>
    %cst_23 = arith.constant dense<0.000000e+00> : vector<8xf32>
    %77 = vector.multi_reduction <add>, %76, %cst_23 [1] : vector<8x8xf32> to vector<8xf32>
    %78 = vector.shape_cast %77 : vector<8xf32> to vector<8x1xf32>
    %79 = tpu.reciprocal %78 {approx = true} : vector<8x1xf32> -> vector<8x1xf32>
    %80 = vector.broadcast %79 : vector<8x1xf32> to vector<8x8xf32>
    %81 = arith.mulf %76, %80 : vector<8x8xf32>
    %82 = arith.truncf %81 : vector<8x8xf32> to vector<8x8xbf16>
    %cst_24 = arith.constant dense<0.000000e+00> : vector<8x8xf32>
    %83 = tpu.matmul %82, %70, %cst_24 {dimension_numbers = #tpu.dot_dimension_numbers<[1], [0], [0], [1], [0, 0, 1, 1], [], []>} : vector<8x8xbf16>, vector<8x8xbf16>, vector<8x8xf32> -> vector<8x8xf32>
    %84 = vector.extract_strided_slice %26 {offsets = [0, 24], sizes = [8, 8], strides = [1, 1]} : vector<8x96xf32> to vector<8x8xf32>
    %85 = arith.truncf %84 : vector<8x8xf32> to vector<8x8xbf16>
    %86 = vector.extract_strided_slice %26 {offsets = [0, 56], sizes = [8, 8], strides = [1, 1]} : vector<8x96xf32> to vector<8x8xf32>
    %87 = arith.truncf %86 : vector<8x8xf32> to vector<8x8xbf16>
    %88 = vector.extract_strided_slice %26 {offsets = [0, 88], sizes = [8, 8], strides = [1, 1]} : vector<8x96xf32> to vector<8x8xf32>
    %89 = arith.truncf %88 : vector<8x8xf32> to vector<8x8xbf16>
    "tpu.trace_start"() <{level = 10 : i32, message = "qd,kd->qk"}> : () -> ()
    %cst_25 = arith.constant dense<0.000000e+00> : vector<8x8xf32>
    %90 = tpu.matmul %85, %87, %cst_25 {dimension_numbers = #tpu.dot_dimension_numbers<[1], [1], [0], [0], [0, 0, 1, 0], [], []>} : vector<8x8xbf16>, vector<8x8xbf16>, vector<8x8xf32> -> vector<8x8xf32>
    "tpu.trace_stop"() : () -> ()
    %cst_26 = arith.constant dense<0xFF800000> : vector<8xf32>
    %91 = vector.multi_reduction <maximumf>, %90, %cst_26 [1] : vector<8x8xf32> to vector<8xf32>
    %92 = vector.shape_cast %91 : vector<8xf32> to vector<8x1xf32>
    %93 = vector.broadcast %92 : vector<8x1xf32> to vector<8x8xf32>
    %94 = arith.subf %90, %93 : vector<8x8xf32>
    %95 = math.exp %94 : vector<8x8xf32>
    %cst_27 = arith.constant dense<0.000000e+00> : vector<8xf32>
    %96 = vector.multi_reduction <add>, %95, %cst_27 [1] : vector<8x8xf32> to vector<8xf32>
    %97 = vector.shape_cast %96 : vector<8xf32> to vector<8x1xf32>
    %98 = tpu.reciprocal %97 {approx = true} : vector<8x1xf32> -> vector<8x1xf32>
    %99 = vector.broadcast %98 : vector<8x1xf32> to vector<8x8xf32>
    %100 = arith.mulf %95, %99 : vector<8x8xf32>
    %101 = arith.truncf %100 : vector<8x8xf32> to vector<8x8xbf16>
    %cst_28 = arith.constant dense<0.000000e+00> : vector<8x8xf32>
    %102 = tpu.matmul %101, %89, %cst_28 {dimension_numbers = #tpu.dot_dimension_numbers<[1], [0], [0], [1], [0, 0, 1, 1], [], []>} : vector<8x8xbf16>, vector<8x8xbf16>, vector<8x8xf32> -> vector<8x8xf32>
    %103 = tpu.concatenate %45, %64, %83, %102 in 1 : vector<8x8xf32>, vector<8x8xf32>, vector<8x8xf32>, vector<8x8xf32> -> vector<8x32xf32>
    %104 = arith.truncf %103 : vector<8x32xf32> to vector<8x32xbf16>
    %c0_29 = arith.constant 0 : index
    %c0_30 = arith.constant 0 : index
    %105 = vector.load %arg3[%c0_29, %c0_30] : memref<32x32xbf16, #tpu.memory_space<vmem>>, vector<32x32xbf16>
    %cst_31 = arith.constant dense<0.000000e+00> : vector<8x32xf32>
    %106 = tpu.matmul %104, %105, %cst_31 {dimension_numbers = #tpu.dot_dimension_numbers<[1], [0], [0], [1], [0, 0, 1, 1], [], []>} : vector<8x32xbf16>, vector<32x32xbf16>, vector<8x32xf32> -> vector<8x32xf32>
    %c0_32 = arith.constant 0 : index
    %c0_33 = arith.constant 0 : index
    %107 = vector.load %arg4[%c0_32, %c0_33] : memref<1x32xf32, #tpu.memory_space<vmem>>, vector<1x32xf32>
    %108 = vector.broadcast %107 : vector<1x32xf32> to vector<8x32xf32>
    %109 = arith.addf %106, %108 : vector<8x32xf32>
    %110 = arith.addf %1, %109 : vector<8x32xf32>
    %c0_34 = arith.constant 0 : index
    %c0_35 = arith.constant 0 : index
    %111 = vector.load %arg13[%c0_34, %c0_35] : memref<1x32xf32, #tpu.memory_space<vmem>>, vector<1x32xf32>
    %c0_36 = arith.constant 0 : index
    %c0_37 = arith.constant 0 : index
    %112 = vector.load %arg14[%c0_36, %c0_37] : memref<1x32xf32, #tpu.memory_space<vmem>>, vector<1x32xf32>
    %cst_38 = arith.constant dense<0.000000e+00> : vector<8xf32>
    %113 = vector.multi_reduction <add>, %110, %cst_38 [1] : vector<8x32xf32> to vector<8xf32>
    %114 = vector.shape_cast %113 : vector<8xf32> to vector<8x1xf32>
    %cst_39 = arith.constant 3.200000e+01 : f32
    %115 = vector.broadcast %cst_39 : f32 to vector<8x1xf32>
    %116 = arith.divf %114, %115 : vector<8x1xf32>
    %117 = vector.broadcast %116 : vector<8x1xf32> to vector<8x32xf32>
    %118 = arith.subf %110, %117 : vector<8x32xf32>
    %119 = arith.mulf %118, %118 : vector<8x32xf32>
    %cst_40 = arith.constant dense<0.000000e+00> : vector<8xf32>
    %120 = vector.multi_reduction <add>, %119, %cst_40 [1] : vector<8x32xf32> to vector<8xf32>
    %121 = vector.shape_cast %120 : vector<8xf32> to vector<8x1xf32>
    %cst_41 = arith.constant 3.200000e+01 : f32
    %122 = vector.broadcast %cst_41 : f32 to vector<8x1xf32>
    %123 = arith.divf %121, %122 : vector<8x1xf32>
    %cst_42 = arith.constant 9.99999974E-6 : f32
    %124 = vector.broadcast %cst_42 : f32 to vector<8x1xf32>
    %125 = arith.addf %123, %124 : vector<8x1xf32>
    %126 = math.rsqrt %125 : vector<8x1xf32>
    %127 = vector.broadcast %126 : vector<8x1xf32> to vector<8x32xf32>
    %128 = arith.mulf %118, %127 : vector<8x32xf32>
    %129 = vector.broadcast %111 : vector<1x32xf32> to vector<8x32xf32>
    %130 = arith.mulf %128, %129 : vector<8x32xf32>
    %131 = vector.broadcast %112 : vector<1x32xf32> to vector<8x32xf32>
    %132 = arith.addf %130, %131 : vector<8x32xf32>
    %133 = arith.truncf %132 : vector<8x32xf32> to vector<8x32xbf16>
    %c0_43 = arith.constant 0 : index
    %c0_44 = arith.constant 0 : index
    %134 = vector.load %arg15[%c0_43, %c0_44] : memref<32x16xbf16, #tpu.memory_space<vmem>>, vector<32x16xbf16>
    %cst_45 = arith.constant dense<0.000000e+00> : vector<8x16xf32>
    %135 = tpu.matmul %133, %134, %cst_45 {dimension_numbers = #tpu.dot_dimension_numbers<[1], [0], [0], [1], [0, 0, 1, 1], [], []>} : vector<8x32xbf16>, vector<32x16xbf16>, vector<8x16xf32> -> vector<8x16xf32>
    %c0_46 = arith.constant 0 : index
    %c0_47 = arith.constant 0 : index
    %136 = vector.load %arg16[%c0_46, %c0_47] : memref<1x16xf32, #tpu.memory_space<vmem>>, vector<1x16xf32>
    %137 = vector.broadcast %136 : vector<1x16xf32> to vector<8x16xf32>
    %138 = arith.addf %135, %137 : vector<8x16xf32>
    %cst_48 = arith.constant 0.000000e+00 : f32
    %139 = vector.broadcast %cst_48 : f32 to vector<8x16xf32>
    %140 = arith.maximumf %138, %139 : vector<8x16xf32>
    %141 = arith.truncf %140 : vector<8x16xf32> to vector<8x16xbf16>
    %c0_49 = arith.constant 0 : index
    %c0_50 = arith.constant 0 : index
    %142 = vector.load %arg17[%c0_49, %c0_50] : memref<16x32xbf16, #tpu.memory_space<vmem>>, vector<16x32xbf16>
    %cst_51 = arith.constant dense<0.000000e+00> : vector<8x32xf32>
    %143 = tpu.matmul %141, %142, %cst_51 {dimension_numbers = #tpu.dot_dimension_numbers<[1], [0], [0], [1], [0, 0, 1, 1], [], []>} : vector<8x16xbf16>, vector<16x32xbf16>, vector<8x32xf32> -> vector<8x32xf32>
    %c0_52 = arith.constant 0 : index
    %c0_53 = arith.constant 0 : index
    %144 = vector.load %arg18[%c0_52, %c0_53] : memref<1x32xf32, #tpu.memory_space<vmem>>, vector<1x32xf32>
    %145 = vector.broadcast %144 : vector<1x32xf32> to vector<8x32xf32>
    %146 = arith.addf %143, %145 : vector<8x32xf32>
    %c0_54 = arith.constant 0 : index
    %c0_55 = arith.constant 0 : index
    %147 = vector.load %arg11[%c0_54, %c0_55] : memref<1x32xf32, #tpu.memory_space<vmem>>, vector<1x32xf32>
    %c0_56 = arith.constant 0 : index
    %c0_57 = arith.constant 0 : index
    %148 = vector.load %arg12[%c0_56, %c0_57] : memref<1x32xf32, #tpu.memory_space<vmem>>, vector<1x32xf32>
    %cst_58 = arith.constant dense<0.000000e+00> : vector<8xf32>
    %149 = vector.multi_reduction <add>, %110, %cst_58 [1] : vector<8x32xf32> to vector<8xf32>
    %150 = vector.shape_cast %149 : vector<8xf32> to vector<8x1xf32>
    %cst_59 = arith.constant 3.200000e+01 : f32
    %151 = vector.broadcast %cst_59 : f32 to vector<8x1xf32>
    %152 = arith.divf %150, %151 : vector<8x1xf32>
    %153 = vector.broadcast %152 : vector<8x1xf32> to vector<8x32xf32>
    %154 = arith.subf %110, %153 : vector<8x32xf32>
    %155 = arith.mulf %154, %154 : vector<8x32xf32>
    %cst_60 = arith.constant dense<0.000000e+00> : vector<8xf32>
    %156 = vector.multi_reduction <add>, %155, %cst_60 [1] : vector<8x32xf32> to vector<8xf32>
    %157 = vector.shape_cast %156 : vector<8xf32> to vector<8x1xf32>
    %cst_61 = arith.constant 3.200000e+01 : f32
    %158 = vector.broadcast %cst_61 : f32 to vector<8x1xf32>
    %159 = arith.divf %157, %158 : vector<8x1xf32>
    %cst_62 = arith.constant 9.99999974E-6 : f32
    %160 = vector.broadcast %cst_62 : f32 to vector<8x1xf32>
    %161 = arith.addf %159, %160 : vector<8x1xf32>
    %162 = math.rsqrt %161 : vector<8x1xf32>
    %163 = vector.broadcast %162 : vector<8x1xf32> to vector<8x32xf32>
    %164 = arith.mulf %154, %163 : vector<8x32xf32>
    %165 = vector.broadcast %147 : vector<1x32xf32> to vector<8x32xf32>
    %166 = arith.mulf %164, %165 : vector<8x32xf32>
    %167 = vector.broadcast %148 : vector<1x32xf32> to vector<8x32xf32>
    %168 = arith.addf %166, %167 : vector<8x32xf32>
    %169 = arith.truncf %168 : vector<8x32xf32> to vector<8x32xbf16>
    %c0_63 = arith.constant 0 : index
    %c0_64 = arith.constant 0 : index
    %170 = vector.load %arg7[%c0_63, %c0_64] : memref<32x128xbf16, #tpu.memory_space<vmem>>, vector<32x128xbf16>
    %cst_65 = arith.constant dense<0.000000e+00> : vector<8x128xf32>
    %171 = tpu.matmul %169, %170, %cst_65 {dimension_numbers = #tpu.dot_dimension_numbers<[1], [0], [0], [1], [0, 0, 1, 1], [], []>} : vector<8x32xbf16>, vector<32x128xbf16>, vector<8x128xf32> -> vector<8x128xf32>
    %c0_66 = arith.constant 0 : index
    %c0_67 = arith.constant 0 : index
    %172 = vector.load %arg8[%c0_66, %c0_67] : memref<1x128xf32, #tpu.memory_space<vmem>>, vector<1x128xf32>
    %173 = vector.broadcast %172 : vector<1x128xf32> to vector<8x128xf32>
    %174 = arith.addf %171, %173 : vector<8x128xf32>
    %cst_68 = arith.constant 0.707106769 : f32
    %175 = vector.broadcast %cst_68 : f32 to vector<8x128xf32>
    %176 = arith.mulf %174, %175 : vector<8x128xf32>
    %177 = math.absf %176 : vector<8x128xf32>
    %cst_69 = arith.constant 0.327591091 : f32
    %178 = vector.broadcast %cst_69 : f32 to vector<8x128xf32>
    %179 = arith.mulf %178, %177 : vector<8x128xf32>
    %cst_70 = arith.constant 1.000000e+00 : f32
    %180 = vector.broadcast %cst_70 : f32 to vector<8x128xf32>
    %181 = arith.addf %180, %179 : vector<8x128xf32>
    %cst_71 = arith.constant 1.000000e+00 : f32
    %182 = vector.broadcast %cst_71 : f32 to vector<8x128xf32>
    %183 = arith.divf %182, %181 : vector<8x128xf32>
    %cst_72 = arith.constant 1.06140542 : f32
    %184 = vector.broadcast %cst_72 : f32 to vector<8x128xf32>
    %185 = arith.mulf %183, %184 : vector<8x128xf32>
    %cst_73 = arith.constant -1.45315206 : f32
    %186 = vector.broadcast %cst_73 : f32 to vector<8x128xf32>
    %187 = arith.addf %186, %185 : vector<8x128xf32>
    %188 = arith.mulf %183, %187 : vector<8x128xf32>
    %cst_74 = arith.constant 1.42141378 : f32
    %189 = vector.broadcast %cst_74 : f32 to vector<8x128xf32>
    %190 = arith.addf %189, %188 : vector<8x128xf32>
    %191 = arith.mulf %183, %190 : vector<8x128xf32>
    %cst_75 = arith.constant -0.284496725 : f32
    %192 = vector.broadcast %cst_75 : f32 to vector<8x128xf32>
    %193 = arith.addf %192, %191 : vector<8x128xf32>
    %194 = arith.mulf %183, %193 : vector<8x128xf32>
    %cst_76 = arith.constant 0.254829586 : f32
    %195 = vector.broadcast %cst_76 : f32 to vector<8x128xf32>
    %196 = arith.addf %195, %194 : vector<8x128xf32>
    %197 = arith.mulf %183, %196 : vector<8x128xf32>
    %cst_77 = arith.constant 0.000000e+00 : f32
    %198 = vector.broadcast %cst_77 : f32 to vector<8x128xf32>
    %199 = arith.subf %198, %177 : vector<8x128xf32>
    %200 = arith.mulf %199, %177 : vector<8x128xf32>
    %201 = math.exp %200 : vector<8x128xf32>
    %202 = arith.mulf %197, %201 : vector<8x128xf32>
    %cst_78 = arith.constant 1.000000e+00 : f32
    %203 = vector.broadcast %cst_78 : f32 to vector<8x128xf32>
    %204 = arith.subf %203, %202 : vector<8x128xf32>
    %cst_79 = arith.constant 0.000000e+00 : f32
    %205 = vector.broadcast %cst_79 : f32 to vector<8x128xf32>
    %206 = arith.cmpf oge, %176, %205 : vector<8x128xf32>
    %cst_80 = arith.constant 0.000000e+00 : f32
    %207 = vector.broadcast %cst_80 : f32 to vector<8x128xf32>
    %208 = arith.subf %207, %204 : vector<8x128xf32>
    %209 = arith.select %206, %204, %208 : vector<8x128xi1>, vector<8x128xf32>
    %cst_81 = arith.constant 5.000000e-01 : f32
    %210 = vector.broadcast %cst_81 : f32 to vector<8x128xf32>
    %211 = arith.mulf %210, %174 : vector<8x128xf32>
    %cst_82 = arith.constant 1.000000e+00 : f32
    %212 = vector.broadcast %cst_82 : f32 to vector<8x128xf32>
    %213 = arith.addf %212, %209 : vector<8x128xf32>
    %214 = arith.mulf %211, %213 : vector<8x128xf32>
    %215 = arith.truncf %214 : vector<8x128xf32> to vector<8x128xbf16>
    %c0_83 = arith.constant 0 : index
    %c0_84 = arith.constant 0 : index
    %216 = vector.load %arg9[%c0_83, %c0_84] : memref<128x32xbf16, #tpu.memory_space<vmem>>, vector<128x32xbf16>
    %cst_85 = arith.constant dense<0.000000e+00> : vector<8x32xf32>
    %217 = tpu.matmul %215, %216, %cst_85 {dimension_numbers = #tpu.dot_dimension_numbers<[1], [0], [0], [1], [0, 0, 1, 1], [], []>} : vector<8x128xbf16>, vector<128x32xbf16>, vector<8x32xf32> -> vector<8x32xf32>
    %c0_86 = arith.constant 0 : index
    %c0_87 = arith.constant 0 : index
    %218 = vector.load %arg10[%c0_86, %c0_87] : memref<1x32xf32, #tpu.memory_space<vmem>>, vector<1x32xf32>
    %219 = vector.broadcast %218 : vector<1x32xf32> to vector<8x32xf32>
    %220 = arith.addf %217, %219 : vector<8x32xf32>
    %221 = arith.addf %110, %220 : vector<8x32xf32>
    %222 = arith.addf %221, %146 : vector<8x32xf32>
    %c0_88 = arith.constant 0 : index
    %c0_89 = arith.constant 0 : index
    %c0_90 = arith.constant 0 : index
    %223 = vector.load %arg19[%c0_88, %c0_89, %c0_90] : memref<1x8x32xf32, #tpu.memory_space<vmem>>, vector<1x8x32xf32>
    %224 = vector.shape_cast %223 : vector<1x8x32xf32> to vector<8x32xf32>
    %225 = vector.shape_cast %222 : vector<8x32xf32> to vector<1x8x32xf32>
    tpu.vector_store %arg19[%c0_88, %c0_89, %c0_90], %225 {strides = array<i32>} : memref<1x8x32xf32, #tpu.memory_space<vmem>>, vector<1x8x32xf32>,
    return
  }
  func.func @transform_0(%arg0: i32) -> (i32, i32, i32) {
    %c0_i32 = arith.constant 0 : i32
    %c0_i32_0 = arith.constant 0 : i32
    %c0_i32_1 = arith.constant 0 : i32
    return %arg0, %c0_i32, %c0_i32_0 : i32, i32, i32
  }
  func.func @transform_1(%arg0: i32) -> (i32, i32) {
    %c0_i32 = arith.constant 0 : i32
    %c0_i32_0 = arith.constant 0 : i32
    %c0_i32_1 = arith.constant 0 : i32
    return %c0_i32, %c0_i32_0 : i32, i32
  }
  func.func @transform_2(%arg0: i32) -> (i32, i32) {
    %c0_i32 = arith.constant 0 : i32
    %c0_i32_0 = arith.constant 0 : i32
    %c0_i32_1 = arith.constant 0 : i32
    return %c0_i32, %c0_i32_0 : i32, i32
  }
  func.func @transform_3(%arg0: i32) -> (i32, i32) {
    %c0_i32 = arith.constant 0 : i32
    %c0_i32_0 = arith.constant 0 : i32
    %c0_i32_1 = arith.constant 0 : i32
    return %c0_i32, %c0_i32_0 : i32, i32
  }
  func.func @transform_4(%arg0: i32) -> (i32, i32) {
    %c0_i32 = arith.constant 0 : i32
    %c0_i32_0 = arith.constant 0 : i32
    %c0_i32_1 = arith.constant 0 : i32
    return %c0_i32, %c0_i32_0 : i32, i32
  }
  func.func @transform_5(%arg0: i32) -> (i32, i32) {
    %c0_i32 = arith.constant 0 : i32
    %c0_i32_0 = arith.constant 0 : i32
    %c0_i32_1 = arith.constant 0 : i32
    return %c0_i32, %c0_i32_0 : i32, i32
  }
  func.func @transform_6(%arg0: i32) -> (i32, i32) {
    %c0_i32 = arith.constant 0 : i32
    %c0_i32_0 = arith.constant 0 : i32
    %c0_i32_1 = arith.constant 0 : i32
    return %c0_i32, %c0_i32_0 : i32, i32
  }
  func.func @transform_7(%arg0: i32) -> (i32, i32) {
    %c0_i32 = arith.constant 0 : i32
    %c0_i32_0 = arith.constant 0 : i32
    %c0_i32_1 = arith.constant 0 : i32
    return %c0_i32, %c0_i32_0 : i32, i32
  }
  func.func @transform_8(%arg0: i32) -> (i32, i32) {
    %c0_i32 = arith.constant 0 : i32
    %c0_i32_0 = arith.constant 0 : i32
    %c0_i32_1 = arith.constant 0 : i32
    return %c0_i32, %c0_i32_0 : i32, i32
  }
  func.func @transform_9(%arg0: i32) -> (i32, i32) {
    %c0_i32 = arith.constant 0 : i32
    %c0_i32_0 = arith.constant 0 : i32
    %c0_i32_1 = arith.constant 0 : i32
    return %c0_i32, %c0_i32_0 : i32, i32
  }
  func.func @transform_10(%arg0: i32) -> (i32, i32) {
    %c0_i32 = arith.constant 0 : i32
    %c0_i32_0 = arith.constant 0 : i32
    %c0_i32_1 = arith.constant 0 : i32
    return %c0_i32, %c0_i32_0 : i32, i32
  }
  func.func @transform_11(%arg0: i32) -> (i32, i32) {
    %c0_i32 = arith.constant 0 : i32
    %c0_i32_0 = arith.constant 0 : i32
    %c0_i32_1 = arith.constant 0 : i32
    return %c0_i32, %c0_i32_0 : i32, i32
  }
  func.func @transform_12(%arg0: i32) -> (i32, i32) {
    %c0_i32 = arith.constant 0 : i32
    %c0_i32_0 = arith.constant 0 : i32
    %c0_i32_1 = arith.constant 0 : i32
    return %c0_i32, %c0_i32_0 : i32, i32
  }
  func.func @transform_13(%arg0: i32) -> (i32, i32) {
    %c0_i32 = arith.constant 0 : i32
    %c0_i32_0 = arith.constant 0 : i32
    %c0_i32_1 = arith.constant 0 : i32
    return %c0_i32, %c0_i32_0 : i32, i32
  }
  func.func @transform_14(%arg0: i32) -> (i32, i32) {
    %c0_i32 = arith.constant 0 : i32
    %c0_i32_0 = arith.constant 0 : i32
    %c0_i32_1 = arith.constant 0 : i32
    return %c0_i32, %c0_i32_0 : i32, i32
  }
  func.func @transform_15(%arg0: i32) -> (i32, i32) {
    %c0_i32 = arith.constant 0 : i32
    %c0_i32_0 = arith.constant 0 : i32
    %c0_i32_1 = arith.constant 0 : i32
    return %c0_i32, %c0_i32_0 : i32, i32
  }
  func.func @transform_16(%arg0: i32) -> (i32, i32) {
    %c0_i32 = arith.constant 0 : i32
    %c0_i32_0 = arith.constant 0 : i32
    %c0_i32_1 = arith.constant 0 : i32
    return %c0_i32, %c0_i32_0 : i32, i32
  }
  func.func @transform_17(%arg0: i32) -> (i32, i32) {
    %c0_i32 = arith.constant 0 : i32
    %c0_i32_0 = arith.constant 0 : i32
    %c0_i32_1 = arith.constant 0 : i32
    return %c0_i32, %c0_i32_0 : i32, i32
  }
  func.func @transform_18(%arg0: i32) -> (i32, i32, i32) {
    %c0_i32 = arith.constant 0 : i32
    %c0_i32_0 = arith.constant 0 : i32
    %c0_i32_1 = arith.constant 0 : i32
    return %arg0, %c0_i32, %c0_i32_0 : i32, i32, i32
  }
}

</mosaic_0001>

<llo_original>
// kernel: tpu_custom_call.1
$region0: #{tpu_custom_call.1}
  #allocation0 [shape = 'u32[]', space=smem, size = 0x4, offset = 0x4, fixed_abs, tag = 'smem constant byte address 0x4 - core index']
  #allocation1 [shape = 'u32[72,128]{1,0:T(1,128)}', space=vmem, size = 0x9000, scoped, tag = 'internal scratch']
  %s0 = inlined_call_operand.vmem [shape: f32[2,8,32], index: 0, kind: input, shape index: {}]
  %s1 = inlined_call_operand.vmem [shape: bf16[32,96], index: 1, kind: input, shape index: {}]
  %s2 = inlined_call_operand.vmem [shape: bf16[32,32], index: 2, kind: input, shape index: {}]
  %s3 = inlined_call_operand.vmem [shape: f32[1,32], index: 3, kind: input, shape index: {}]
  %s4 = inlined_call_operand.vmem [shape: f32[1,32], index: 4, kind: input, shape index: {}]
  %s5 = inlined_call_operand.vmem [shape: f32[1,32], index: 5, kind: input, shape index: {}]
  %s6 = inlined_call_operand.vmem [shape: bf16[32,128], index: 6, kind: input, shape index: {}]
  %s7 = inlined_call_operand.vmem [shape: f32[1,128], index: 7, kind: input, shape index: {}]
  %s8 = inlined_call_operand.vmem [shape: bf16[128,32], index: 8, kind: input, shape index: {}]
  %s9 = inlined_call_operand.vmem [shape: f32[1,32], index: 9, kind: input, shape index: {}]
  %s10 = inlined_call_operand.vmem [shape: f32[1,32], index: 10, kind: input, shape index: {}]
  %s11 = inlined_call_operand.vmem [shape: f32[1,32], index: 11, kind: input, shape index: {}]
  %s12 = inlined_call_operand.vmem [shape: f32[1,32], index: 12, kind: input, shape index: {}]
  %s13 = inlined_call_operand.vmem [shape: f32[1,32], index: 13, kind: input, shape index: {}]
  %s14 = inlined_call_operand.vmem [shape: bf16[32,16], index: 14, kind: input, shape index: {}]
  %s15 = inlined_call_operand.vmem [shape: f32[1,16], index: 15, kind: input, shape index: {}]
  %s16 = inlined_call_operand.vmem [shape: bf16[16,32], index: 16, kind: input, shape index: {}]
  %s17 = inlined_call_operand.vmem [shape: f32[1,32], index: 17, kind: input, shape index: {}]
  %s18 = inlined_call_operand.hbm [shape: f32[2,8,32], index: 18, kind: output, shape index: {}]
  %s19 = sld [smem:[#allocation0]]
  $region105: #{tpu_custom_call.1} parent=0
    _
  %s21 = ssub.s32 1, %s19
  %s22 = scalar_select 0, %s21, %s19
  $region1: #{tpu_custom_call.1} parent=0
    #allocation2 [shape = 'u8[8192]{0}', space=vmem, size = 0x2000, scoped, tag = 'output window, operand 0']
    #allocation3 [shape = 's32[2]{0}', space=sflag, size = 0x8, scoped, tag = 'scoped memory for tpu_custom_call.1']
    %23 = vsyncpa [#allocation3], 0
    %s24 = scalar_lea.sflag [#allocation3], 1
    %25 = vsyncpa %s24, 0
    loop: start=0, step=1, limit=4
    $region2: #{tpu_custom_call.1} parent=1 // loop_pre_header
      _
    $region3: #{tpu_custom_call.1} parent=1 // loop_header
      %s27 = sphi 0, %s31
      %p28 = scmp.ge.s32.totalorder %s27, 4
      %s37 = sphi 0, %s39
      %s40 = sphi 0, %s37
      %s41 = sphi 0, %s40
      %s57 = sphi 0, %s41
      %s61 = sphi 0, %s61
      %s63 = sphi 0, %s61
      %s64 = sphi 0, %s63
      %s78 = sphi 0, %s64
      %s82 = sphi 0, %s82
      %s84 = sphi 0, %s82
      %s85 = sphi 0, %s84
      %s99 = sphi 0, %s85
      %s103 = sphi 0, %s103
      %s105 = sphi 0, %s103
      %s106 = sphi 0, %s105
      %s120 = sphi 0, %s106
      %s124 = sphi 0, %s124
      %s126 = sphi 0, %s124
      %s127 = sphi 0, %s126
      %s141 = sphi 0, %s127
      %s145 = sphi 0, %s145
      %s147 = sphi 0, %s145
      %s148 = sphi 0, %s147
      %s162 = sphi 0, %s148
      %s166 = sphi 0, %s166
      %s168 = sphi 0, %s166
      %s169 = sphi 0, %s168
      %s183 = sphi 0, %s169
      %s187 = sphi 0, %s187
      %s189 = sphi 0, %s187
      %s190 = sphi 0, %s189
      %s204 = sphi 0, %s190
      %s208 = sphi 0, %s208
      %s210 = sphi 0, %s208
      %s211 = sphi 0, %s210
      %s225 = sphi 0, %s211
      %s229 = sphi 0, %s229
      %s231 = sphi 0, %s229
      %s232 = sphi 0, %s231
      %s246 = sphi 0, %s232
      %s250 = sphi 0, %s250
      %s252 = sphi 0, %s250
      %s253 = sphi 0, %s252
      %s267 = sphi 0, %s253
      %s271 = sphi 0, %s271
      %s273 = sphi 0, %s271
      %s274 = sphi 0, %s273
      %s288 = sphi 0, %s274
      %s292 = sphi 0, %s292
      %s294 = sphi 0, %s292
      %s295 = sphi 0, %s294
      %s309 = sphi 0, %s295
      %s313 = sphi 0, %s313
      %s315 = sphi 0, %s313
      %s316 = sphi 0, %s315
      %s330 = sphi 0, %s316
      %s334 = sphi 0, %s334
      %s336 = sphi 0, %s334
      %s337 = sphi 0, %s336
      %s351 = sphi 0, %s337
      %s355 = sphi 0, %s355
      %s357 = sphi 0, %s355
      %s358 = sphi 0, %s357
      %s372 = sphi 0, %s358
      %s376 = sphi 0, %s376
      %s378 = sphi 0, %s376
      %s379 = sphi 0, %s378
      %s393 = sphi 0, %s379
      %s397 = sphi 0, %s397
      %s399 = sphi 0, %s397
      %s400 = sphi 0, %s399
      %s414 = sphi 0, %s400
      %s420 = sphi 0, %s422
      %s423 = sphi 0, %s420
      %s424 = sphi 0, %s423
      %s440 = sphi 0, %s424
    $region4: #{tpu_custom_call.1} parent=1 // loop_header_branch
      %30 = sbr.rel (%p28) target = $region8
    $region5: #{tpu_custom_call.1} parent=1 // loop_body
      %s32 = ssub.s32 %s27, 1
      %s33 = ssub.s32 %s27, 2
      %s34 = sadd.s32 %s27, 1
      %s35 = ssub.s32 %s27, %s34
      %p36 = scmp.eq.s32.totalorder %s35, 0
      %s38 = sadd.s32 %s37, 1
      %s39 = scalar_select %p36, %s37, %s38
      %p42 = pneg %p36
      %p43 = scmp.eq.s32.totalorder %s27, 1
      %p44 = por %p42, %p43
      %p45 = scmp.ne.s32.totalorder %s37, %s40
      %p46 = scmp.eq.s32.totalorder %s27, 0
      %p47 = por %p45, %p46
      %p48 = scmp.ne.s32.totalorder %s37, %s40
      %p49 = scmp.eq.s32.totalorder %s32, 1
      %p50 = por %p48, %p49
      %p51 = scmp.ne.s32.totalorder %s40, %s41
      %p52 = scmp.eq.s32.totalorder %s32, 0
      %p53 = por %p51, %p52
      %p54 = scmp.ne.s32.totalorder %s40, %s41
      %p55 = scmp.eq.s32.totalorder %s33, 1
      %p56 = por %p54, %p55
      %p58 = scmp.ne.s32.totalorder %s41, %s57
      %p59 = scmp.eq.s32.totalorder %s33, 0
      %p60 = por %p58, %p59
      %s62 = sadd.s32 %s61, 1
      %p65 = scmp.eq.s32.totalorder %s27, 1
      %p66 = scmp.ne.s32.totalorder %s61, %s63
      %p67 = scmp.eq.s32.totalorder %s27, 0
      %p68 = por %p66, %p67
      %p69 = scmp.ne.s32.totalorder %s61, %s63
      %p70 = scmp.eq.s32.totalorder %s32, 1
      %p71 = por %p69, %p70
      %p72 = scmp.ne.s32.totalorder %s63, %s64
      %p73 = scmp.eq.s32.totalorder %s32, 0
      %p74 = por %p72, %p73
      %p75 = scmp.ne.s32.totalorder %s63, %s64
      %p76 = scmp.eq.s32.totalorder %s33, 1
      %p77 = por %p75, %p76
      %p79 = scmp.ne.s32.totalorder %s64, %s78
      %p80 = scmp.eq.s32.totalorder %s33, 0
      %p81 = por %p79, %p80
      %s83 = sadd.s32 %s82, 1
      %p86 = scmp.eq.s32.totalorder %s27, 1
      %p87 = scmp.ne.s32.totalorder %s82, %s84
      %p88 = scmp.eq.s32.totalorder %s27, 0
      %p89 = por %p87, %p88
      %p90 = scmp.ne.s32.totalorder %s82, %s84
      %p91 = scmp.eq.s32.totalorder %s32, 1
      %p92 = por %p90, %p91
      %p93 = scmp.ne.s32.totalorder %s84, %s85
      %p94 = scmp.eq.s32.totalorder %s32, 0
      %p95 = por %p93, %p94
      %p96 = scmp.ne.s32.totalorder %s84, %s85
      %p97 = scmp.eq.s32.totalorder %s33, 1
      %p98 = por %p96, %p97
      %p100 = scmp.ne.s32.totalorder %s85, %s99
      %p101 = scmp.eq.s32.totalorder %s33, 0
      %p102 = por %p100, %p101
      %s104 = sadd.s32 %s103, 1
      %p107 = scmp.eq.s32.totalorder %s27, 1
      %p108 = scmp.ne.s32.totalorder %s103, %s105
      %p109 = scmp.eq.s32.totalorder %s27, 0
      %p110 = por %p108, %p109
      %p111 = scmp.ne.s32.totalorder %s103, %s105
      %p112 = scmp.eq.s32.totalorder %s32, 1
      %p113 = por %p111, %p112
      %p114 = scmp.ne.s32.totalorder %s105, %s106
      %p115 = scmp.eq.s32.totalorder %s32, 0
      %p116 = por %p114, %p115
      %p117 = scmp.ne.s32.totalorder %s105, %s106
      %p118 = scmp.eq.s32.totalorder %s33, 1
      %p119 = por %p117, %p118
      %p121 = scmp.ne.s32.totalorder %s106, %s120
      %p122 = scmp.eq.s32.totalorder %s33, 0
      %p123 = por %p121, %p122
      %s125 = sadd.s32 %s124, 1
      %p128 = scmp.eq.s32.totalorder %s27, 1
      %p129 = scmp.ne.s32.totalorder %s124, %s126
      %p130 = scmp.eq.s32.totalorder %s27, 0
      %p131 = por %p129, %p130
      %p132 = scmp.ne.s32.totalorder %s124, %s126
      %p133 = scmp.eq.s32.totalorder %s32, 1
      %p134 = por %p132, %p133
      %p135 = scmp.ne.s32.totalorder %s126, %s127
      %p136 = scmp.eq.s32.totalorder %s32, 0
      %p137 = por %p135, %p136
      %p138 = scmp.ne.s32.totalorder %s126, %s127
      %p139 = scmp.eq.s32.totalorder %s33, 1
      %p140 = por %p138, %p139
      %p142 = scmp.ne.s32.totalorder %s127, %s141
      %p143 = scmp.eq.s32.totalorder %s33, 0
      %p144 = por %p142, %p143
      %s146 = sadd.s32 %s145, 1
      %p149 = scmp.eq.s32.totalorder %s27, 1
      %p150 = scmp.ne.s32.totalorder %s145, %s147
      %p151 = scmp.eq.s32.totalorder %s27, 0
      %p152 = por %p150, %p151
      %p153 = scmp.ne.s32.totalorder %s145, %s147
      %p154 = scmp.eq.s32.totalorder %s32, 1
      %p155 = por %p153, %p154
      %p156 = scmp.ne.s32.totalorder %s147, %s148
      %p157 = scmp.eq.s32.totalorder %s32, 0
      %p158 = por %p156, %p157
      %p159 = scmp.ne.s32.totalorder %s147, %s148
      %p160 = scmp.eq.s32.totalorder %s33, 1
      %p161 = por %p159, %p160
      %p163 = scmp.ne.s32.totalorder %s148, %s162
      %p164 = scmp.eq.s32.totalorder %s33, 0
      %p165 = por %p163, %p164
      %s167 = sadd.s32 %s166, 1
      %p170 = scmp.eq.s32.totalorder %s27, 1
      %p171 = scmp.ne.s32.totalorder %s166, %s168
      %p172 = scmp.eq.s32.totalorder %s27, 0
      %p173 = por %p171, %p172
      %p174 = scmp.ne.s32.totalorder %s166, %s168
      %p175 = scmp.eq.s32.totalorder %s32, 1
      %p176 = por %p174, %p175
      %p177 = scmp.ne.s32.totalorder %s168, %s169
      %p178 = scmp.eq.s32.totalorder %s32, 0
      %p179 = por %p177, %p178
      %p180 = scmp.ne.s32.totalorder %s168, %s169
      %p181 = scmp.eq.s32.totalorder %s33, 1
      %p182 = por %p180, %p181
      %p184 = scmp.ne.s32.totalorder %s169, %s183
      %p185 = scmp.eq.s32.totalorder %s33, 0
      %p186 = por %p184, %p185
      %s188 = sadd.s32 %s187, 1
      %p191 = scmp.eq.s32.totalorder %s27, 1
      %p192 = scmp.ne.s32.totalorder %s187, %s189
      %p193 = scmp.eq.s32.totalorder %s27, 0
      %p194 = por %p192, %p193
      %p195 = scmp.ne.s32.totalorder %s187, %s189
      %p196 = scmp.eq.s32.totalorder %s32, 1
      %p197 = por %p195, %p196
      %p198 = scmp.ne.s32.totalorder %s189, %s190
      %p199 = scmp.eq.s32.totalorder %s32, 0
      %p200 = por %p198, %p199
      %p201 = scmp.ne.s32.totalorder %s189, %s190
      %p202 = scmp.eq.s32.totalorder %s33, 1
      %p203 = por %p201, %p202
      %p205 = scmp.ne.s32.totalorder %s190, %s204
      %p206 = scmp.eq.s32.totalorder %s33, 0
      %p207 = por %p205, %p206
      %s209 = sadd.s32 %s208, 1
      %p212 = scmp.eq.s32.totalorder %s27, 1
      %p213 = scmp.ne.s32.totalorder %s208, %s210
      %p214 = scmp.eq.s32.totalorder %s27, 0
      %p215 = por %p213, %p214
      %p216 = scmp.ne.s32.totalorder %s208, %s210
      %p217 = scmp.eq.s32.totalorder %s32, 1
      %p218 = por %p216, %p217
      %p219 = scmp.ne.s32.totalorder %s210, %s211
      %p220 = scmp.eq.s32.totalorder %s32, 0
      %p221 = por %p219, %p220
      %p222 = scmp.ne.s32.totalorder %s210, %s211
      %p223 = scmp.eq.s32.totalorder %s33, 1
      %p224 = por %p222, %p223
      %p226 = scmp.ne.s32.totalorder %s211, %s225
      %p227 = scmp.eq.s32.totalorder %s33, 0
      %p228 = por %p226, %p227
      %s230 = sadd.s32 %s229, 1
      %p233 = scmp.eq.s32.totalorder %s27, 1
      %p234 = scmp.ne.s32.totalorder %s229, %s231
      %p235 = scmp.eq.s32.totalorder %s27, 0
      %p236 = por %p234, %p235
      %p237 = scmp.ne.s32.totalorder %s229, %s231
      %p238 = scmp.eq.s32.totalorder %s32, 1
      %p239 = por %p237, %p238
      %p240 = scmp.ne.s32.totalorder %s231, %s232
      %p241 = scmp.eq.s32.totalorder %s32, 0
      %p242 = por %p240, %p241
      %p243 = scmp.ne.s32.totalorder %s231, %s232
      %p244 = scmp.eq.s32.totalorder %s33, 1
      %p245 = por %p243, %p244
      %p247 = scmp.ne.s32.totalorder %s232, %s246
      %p248 = scmp.eq.s32.totalorder %s33, 0
      %p249 = por %p247, %p248
      %s251 = sadd.s32 %s250, 1
      %p254 = scmp.eq.s32.totalorder %s27, 1
      %p255 = scmp.ne.s32.totalorder %s250, %s252
      %p256 = scmp.eq.s32.totalorder %s27, 0
      %p257 = por %p255, %p256
      %p258 = scmp.ne.s32.totalorder %s250, %s252
      %p259 = scmp.eq.s32.totalorder %s32, 1
      %p260 = por %p258, %p259
      %p261 = scmp.ne.s32.totalorder %s252, %s253
      %p262 = scmp.eq.s32.totalorder %s32, 0
      %p263 = por %p261, %p262
      %p264 = scmp.ne.s32.totalorder %s252, %s253
      %p265 = scmp.eq.s32.totalorder %s33, 1
      %p266 = por %p264, %p265
      %p268 = scmp.ne.s32.totalorder %s253, %s267
      %p269 = scmp.eq.s32.totalorder %s33, 0
      %p270 = por %p268, %p269
      %s272 = sadd.s32 %s271, 1
      %p275 = scmp.eq.s32.totalorder %s27, 1
      %p276 = scmp.ne.s32.totalorder %s271, %s273
      %p277 = scmp.eq.s32.totalorder %s27, 0
      %p278 = por %p276, %p277
      %p279 = scmp.ne.s32.totalorder %s271, %s273
      %p280 = scmp.eq.s32.totalorder %s32, 1
      %p281 = por %p279, %p280
      %p282 = scmp.ne.s32.totalorder %s273, %s274
      %p283 = scmp.eq.s32.totalorder %s32, 0
      %p284 = por %p282, %p283
      %p285 = scmp.ne.s32.totalorder %s273, %s274
      %p286 = scmp.eq.s32.totalorder %s33, 1
      %p287 = por %p285, %p286
      %p289 = scmp.ne.s32.totalorder %s274, %s288
      %p290 = scmp.eq.s32.totalorder %s33, 0
      %p291 = por %p289, %p290
      %s293 = sadd.s32 %s292, 1
      %p296 = scmp.eq.s32.totalorder %s27, 1
      %p297 = scmp.ne.s32.totalorder %s292, %s294
      %p298 = scmp.eq.s32.totalorder %s27, 0
      %p299 = por %p297, %p298
      %p300 = scmp.ne.s32.totalorder %s292, %s294
      %p301 = scmp.eq.s32.totalorder %s32, 1
      %p302 = por %p300, %p301
      %p303 = scmp.ne.s32.totalorder %s294, %s295
      %p304 = scmp.eq.s32.totalorder %s32, 0
      %p305 = por %p303, %p304
      %p306 = scmp.ne.s32.totalorder %s294, %s295
      %p307 = scmp.eq.s32.totalorder %s33, 1
      %p308 = por %p306, %p307
      %p310 = scmp.ne.s32.totalorder %s295, %s309
      %p311 = scmp.eq.s32.totalorder %s33, 0
      %p312 = por %p310, %p311
      %s314 = sadd.s32 %s313, 1
      %p317 = scmp.eq.s32.totalorder %s27, 1
      %p318 = scmp.ne.s32.totalorder %s313, %s315
      %p319 = scmp.eq.s32.totalorder %s27, 0
      %p320 = por %p318, %p319
      %p321 = scmp.ne.s32.totalorder %s313, %s315
      %p322 = scmp.eq.s32.totalorder %s32, 1
      %p323 = por %p321, %p322
      %p324 = scmp.ne.s32.totalorder %s315, %s316
      %p325 = scmp.eq.s32.totalorder %s32, 0
      %p326 = por %p324, %p325
      %p327 = scmp.ne.s32.totalorder %s315, %s316
      %p328 = scmp.eq.s32.totalorder %s33, 1
      %p329 = por %p327, %p328
      %p331 = scmp.ne.s32.totalorder %s316, %s330
      %p332 = scmp.eq.s32.totalorder %s33, 0
      %p333 = por %p331, %p332
      %s335 = sadd.s32 %s334, 1
      %p338 = scmp.eq.s32.totalorder %s27, 1
      %p339 = scmp.ne.s32.totalorder %s334, %s336
      %p340 = scmp.eq.s32.totalorder %s27, 0
      %p341 = por %p339, %p340
      %p342 = scmp.ne.s32.totalorder %s334, %s336
      %p343 = scmp.eq.s32.totalorder %s32, 1
      %p344 = por %p342, %p343
      %p345 = scmp.ne.s32.totalorder %s336, %s337
      %p346 = scmp.eq.s32.totalorder %s32, 0
      %p347 = por %p345, %p346
      %p348 = scmp.ne.s32.totalorder %s336, %s337
      %p349 = scmp.eq.s32.totalorder %s33, 1
      %p350 = por %p348, %p349
      %p352 = scmp.ne.s32.totalorder %s337, %s351
      %p353 = scmp.eq.s32.totalorder %s33, 0
      %p354 = por %p352, %p353
      %s356 = sadd.s32 %s355, 1
      %p359 = scmp.eq.s32.totalorder %s27, 1
      %p360 = scmp.ne.s32.totalorder %s355, %s357
      %p361 = scmp.eq.s32.totalorder %s27, 0
      %p362 = por %p360, %p361
      %p363 = scmp.ne.s32.totalorder %s355, %s357
      %p364 = scmp.eq.s32.totalorder %s32, 1
      %p365 = por %p363, %p364
      %p366 = scmp.ne.s32.totalorder %s357, %s358
      %p367 = scmp.eq.s32.totalorder %s32, 0
      %p368 = por %p366, %p367
      %p369 = scmp.ne.s32.totalorder %s357, %s358
      %p370 = scmp.eq.s32.totalorder %s33, 1
      %p371 = por %p369, %p370
      %p373 = scmp.ne.s32.totalorder %s358, %s372
      %p374 = scmp.eq.s32.totalorder %s33, 0
      %p375 = por %p373, %p374
      %s377 = sadd.s32 %s376, 1
      %p380 = scmp.eq.s32.totalorder %s27, 1
      %p381 = scmp.ne.s32.totalorder %s376, %s378
      %p382 = scmp.eq.s32.totalorder %s27, 0
      %p383 = por %p381, %p382
      %p384 = scmp.ne.s32.totalorder %s376, %s378
      %p385 = scmp.eq.s32.totalorder %s32, 1
      %p386 = por %p384, %p385
      %p387 = scmp.ne.s32.totalorder %s378, %s379
      %p388 = scmp.eq.s32.totalorder %s32, 0
      %p389 = por %p387, %p388
      %p390 = scmp.ne.s32.totalorder %s378, %s379
      %p391 = scmp.eq.s32.totalorder %s33, 1
      %p392 = por %p390, %p391
      %p394 = scmp.ne.s32.totalorder %s379, %s393
      %p395 = scmp.eq.s32.totalorder %s33, 0
      %p396 = por %p394, %p395
      %s398 = sadd.s32 %s397, 1
      %p401 = scmp.eq.s32.totalorder %s27, 1
      %p402 = scmp.ne.s32.totalorder %s397, %s399
      %p403 = scmp.eq.s32.totalorder %s27, 0
      %p404 = por %p402, %p403
      %p405 = scmp.ne.s32.totalorder %s397, %s399
      %p406 = scmp.eq.s32.totalorder %s32, 1
      %p407 = por %p405, %p406
      %p408 = scmp.ne.s32.totalorder %s399, %s400
      %p409 = scmp.eq.s32.totalorder %s32, 0
      %p410 = por %p408, %p409
      %p411 = scmp.ne.s32.totalorder %s399, %s400
      %p412 = scmp.eq.s32.totalorder %s33, 1
      %p413 = por %p411, %p412
      %p415 = scmp.ne.s32.totalorder %s400, %s414
      %p416 = scmp.eq.s32.totalorder %s33, 0
      %p417 = por %p415, %p416
      %s418 = ssub.s32 %s27, %s34
      %p419 = scmp.eq.s32.totalorder %s418, 0
      %s421 = sadd.s32 %s420, 1
      %s422 = scalar_select %p419, %s420, %s421
      %p425 = pneg %p419
      %p426 = scmp.eq.s32.totalorder %s27, 1
      %p427 = por %p425, %p426
      %p428 = scmp.ne.s32.totalorder %s420, %s423
      %p429 = scmp.eq.s32.totalorder %s27, 0
      %p430 = por %p428, %p429
      %p431 = scmp.ne.s32.totalorder %s420, %s423
      %p432 = scmp.eq.s32.totalorder %s32, 1
      %p433 = por %p431, %p432
      %p434 = scmp.ne.s32.totalorder %s423, %s424
      %p435 = scmp.eq.s32.totalorder %s32, 0
      %p436 = por %p434, %p435
      %p437 = scmp.ne.s32.totalorder %s423, %s424
      %p438 = scmp.eq.s32.totalorder %s33, 1
      %p439 = por %p437, %p438
      %p441 = scmp.ne.s32.totalorder %s424, %s440
      %p442 = scmp.eq.s32.totalorder %s33, 0
      %p443 = por %p441, %p442
      %p444 = scmp.le.s32.totalorder 1, %s27
      %p445 = scmp.lt.s32.totalorder %s27, 3
      %p446 = pnand %p444, %p445
      %p447 = pneg %p446
      // Predicated region
      $region9: #{tpu_custom_call.1} parent=5 // pred_check
        _
      $region10: #{tpu_custom_call.1} parent=5 // pred_check_branch
        %449 = sbr.rel (%p446) target = $region12
      $region11: #{tpu_custom_call.1} parent=5 // pred_region
        %s450 = ssub.s32 %s27, 1
        // Predicated region
        $region13: #{tpu_custom_call.1} parent=11 // pred_check
          %p451 = pneg %p74
        $region14: #{tpu_custom_call.1} parent=11 // pred_check_branch
          %453 = sbr.rel (%p451) target = $region16
        $region15: #{tpu_custom_call.1} parent=11 // pred_region
          _
        $region16: #{tpu_custom_call.1} parent=11 // pred_fallthru
          _
        // Predicated region
        $region17: #{tpu_custom_call.1} parent=11 // pred_check
          %p454 = pneg %p95
        $region18: #{tpu_custom_call.1} parent=11 // pred_check_branch
          %456 = sbr.rel (%p454) target = $region20
        $region19: #{tpu_custom_call.1} parent=11 // pred_region
          _
        $region20: #{tpu_custom_call.1} parent=11 // pred_fallthru
          _
        // Predicated region
        $region21: #{tpu_custom_call.1} parent=11 // pred_check
          %p457 = pneg %p116
        $region22: #{tpu_custom_call.1} parent=11 // pred_check_branch
          %459 = sbr.rel (%p457) target = $region24
        $region23: #{tpu_custom_call.1} parent=11 // pred_region
          _
        $region24: #{tpu_custom_call.1} parent=11 // pred_fallthru
          _
        // Predicated region
        $region25: #{tpu_custom_call.1} parent=11 // pred_check
          %p460 = pneg %p137
        $region26: #{tpu_custom_call.1} parent=11 // pred_check_branch
          %462 = sbr.rel (%p460) target = $region28
        $region27: #{tpu_custom_call.1} parent=11 // pred_region
          _
        $region28: #{tpu_custom_call.1} parent=11 // pred_fallthru
          _
        // Predicated region
        $region29: #{tpu_custom_call.1} parent=11 // pred_check
          %p463 = pneg %p158
        $region30: #{tpu_custom_call.1} parent=11 // pred_check_branch
          %465 = sbr.rel (%p463) target = $region32
        $region31: #{tpu_custom_call.1} parent=11 // pred_region
          _
        $region32: #{tpu_custom_call.1} parent=11 // pred_fallthru
          _
        // Predicated region
        $region33: #{tpu_custom_call.1} parent=11 // pred_check
          %p466 = pneg %p179
        $region34: #{tpu_custom_call.1} parent=11 // pred_check_branch
          %468 = sbr.rel (%p466) target = $region36
        $region35: #{tpu_custom_call.1} parent=11 // pred_region
          _
        $region36: #{tpu_custom_call.1} parent=11 // pred_fallthru
          _
        // Predicated region
        $region37: #{tpu_custom_call.1} parent=11 // pred_check
          %p469 = pneg %p200
        $region38: #{tpu_custom_call.1} parent=11 // pred_check_branch
          %471 = sbr.rel (%p469) target = $region40
        $region39: #{tpu_custom_call.1} parent=11 // pred_region
          _
        $region40: #{tpu_custom_call.1} parent=11 // pred_fallthru
          _
        // Predicated region
        $region41: #{tpu_custom_call.1} parent=11 // pred_check
          %p472 = pneg %p221
        $region42: #{tpu_custom_call.1} parent=11 // pred_check_branch
          %474 = sbr.rel (%p472) target = $region44
        $region43: #{tpu_custom_call.1} parent=11 // pred_region
          _
        $region44: #{tpu_custom_call.1} parent=11 // pred_fallthru
          _
        // Predicated region
        $region45: #{tpu_custom_call.1} parent=11 // pred_check
          %p475 = pneg %p242
        $region46: #{tpu_custom_call.1} parent=11 // pred_check_branch
          %477 = sbr.rel (%p475) target = $region48
        $region47: #{tpu_custom_call.1} parent=11 // pred_region
          _
        $region48: #{tpu_custom_call.1} parent=11 // pred_fallthru
          _
        // Predicated region
        $region49: #{tpu_custom_call.1} parent=11 // pred_check
          %p478 = pneg %p263
        $region50: #{tpu_custom_call.1} parent=11 // pred_check_branch
          %480 = sbr.rel (%p478) target = $region52
        $region51: #{tpu_custom_call.1} parent=11 // pred_region
          _
        $region52: #{tpu_custom_call.1} parent=11 // pred_fallthru
          _
        // Predicated region
        $region53: #{tpu_custom_call.1} parent=11 // pred_check
          %p481 = pneg %p284
        $region54: #{tpu_custom_call.1} parent=11 // pred_check_branch
          %483 = sbr.rel (%p481) target = $region56
        $region55: #{tpu_custom_call.1} parent=11 // pred_region
          _
        $region56: #{tpu_custom_call.1} parent=11 // pred_fallthru
          _
        // Predicated region
        $region57: #{tpu_custom_call.1} parent=11 // pred_check
          %p484 = pneg %p305
        $region58: #{tpu_custom_call.1} parent=11 // pred_check_branch
          %486 = sbr.rel (%p484) target = $region60
        $region59: #{tpu_custom_call.1} parent=11 // pred_region
          _
        $region60: #{tpu_custom_call.1} parent=11 // pred_fallthru
          _
        // Predicated region
        $region61: #{tpu_custom_call.1} parent=11 // pred_check
          %p487 = pneg %p326
        $region62: #{tpu_custom_call.1} parent=11 // pred_check_branch
          %489 = sbr.rel (%p487) target = $region64
        $region63: #{tpu_custom_call.1} parent=11 // pred_region
          _
        $region64: #{tpu_custom_call.1} parent=11 // pred_fallthru
          _
        // Predicated region
        $region65: #{tpu_custom_call.1} parent=11 // pred_check
          %p490 = pneg %p347
        $region66: #{tpu_custom_call.1} parent=11 // pred_check_branch
          %492 = sbr.rel (%p490) target = $region68
        $region67: #{tpu_custom_call.1} parent=11 // pred_region
          _
        $region68: #{tpu_custom_call.1} parent=11 // pred_fallthru
          _
        // Predicated region
        $region69: #{tpu_custom_call.1} parent=11 // pred_check
          %p493 = pneg %p368
        $region70: #{tpu_custom_call.1} parent=11 // pred_check_branch
          %495 = sbr.rel (%p493) target = $region72
        $region71: #{tpu_custom_call.1} parent=11 // pred_region
          _
        $region72: #{tpu_custom_call.1} parent=11 // pred_fallthru
          _
        // Predicated region
        $region73: #{tpu_custom_call.1} parent=11 // pred_check
          %p496 = pneg %p389
        $region74: #{tpu_custom_call.1} parent=11 // pred_check_branch
          %498 = sbr.rel (%p496) target = $region76
        $region75: #{tpu_custom_call.1} parent=11 // pred_region
          _
        $region76: #{tpu_custom_call.1} parent=11 // pred_fallthru
          _
        // Predicated region
        $region77: #{tpu_custom_call.1} parent=11 // pred_check
          %p499 = pneg %p410
        $region78: #{tpu_custom_call.1} parent=11 // pred_check_branch
          %501 = sbr.rel (%p499) target = $region80
        $region79: #{tpu_custom_call.1} parent=11 // pred_region
          _
        $region80: #{tpu_custom_call.1} parent=11 // pred_fallthru
          _
      $region12: #{tpu_custom_call.1} parent=5 // pred_fallthru
        _
      %p502 = scmp.lt.s32.totalorder %s27, 2
      // Predicated region
      $region81: #{tpu_custom_call.1} parent=5 // pred_check
        %p503 = pneg %p502
      $region82: #{tpu_custom_call.1} parent=5 // pred_check_branch
        %505 = sbr.rel (%p503) target = $region84
      $region83: #{tpu_custom_call.1} parent=5 // pred_region
        // Predicated region
        $region85: #{tpu_custom_call.1} parent=83 // pred_check
          %p506 = pneg %p47
        $region86: #{tpu_custom_call.1} parent=83 // pred_check_branch
          %508 = sbr.rel (%p506) target = $region88
        $region87: #{tpu_custom_call.1} parent=83 // pred_region
          %p509 = scmp.lt.s32.totalorder %s27, 1
          %s510 = scalar_select %p509, %s27, 1
          %s511 = smul.addr %s510, 8
          %s512 = scalar_lea.vmem %s0, %s511
        $region88: #{tpu_custom_call.1} parent=83 // pred_fallthru
          _
      $region84: #{tpu_custom_call.1} parent=5 // pred_fallthru
        _
      %p513 = scmp.le.s32.totalorder 1, %s27
      %p514 = scmp.lt.s32.totalorder %s27, 3
      %p515 = pnand %p513, %p514
      %p516 = pneg %p515
      // Predicated region
      $region89: #{tpu_custom_call.1} parent=5 // pred_check
        _
      $region90: #{tpu_custom_call.1} parent=5 // pred_check_branch
        %518 = sbr.rel (%p515) target = $region92
      $region91: #{tpu_custom_call.1} parent=5 // pred_region
        %s519 = ssub.s32 %s27, 1
        %p520 = scmp.lt.s32.totalorder %s32, 1
        %s521 = scalar_select %p520, %s32, 1
        %s522 = smul.addr %s521, 8
        %s523 = scalar_lea.vmem %s0, %s522
        %p524 = pneg %p53
        %p525 = pneg %p50
        %p526 = pneg %p74
        %p527 = pneg %p71
        %p528 = pneg %p95
        %p529 = pneg %p92
        %p530 = pneg %p116
        %p531 = pneg %p113
        %p532 = pneg %p137
        %p533 = pneg %p134
        %p534 = pneg %p158
        %p535 = pneg %p155
        %p536 = pneg %p179
        %p537 = pneg %p176
        %p538 = pneg %p200
        %p539 = pneg %p197
        %p540 = pneg %p221
        %p541 = pneg %p218
        %p542 = pneg %p242
        %p543 = pneg %p239
        %p544 = pneg %p263
        %p545 = pneg %p260
        %p546 = pneg %p284
        %p547 = pneg %p281
        %p548 = pneg %p305
        %p549 = pneg %p302
        %p550 = pneg %p326
        %p551 = pneg %p323
        %p552 = pneg %p347
        %p553 = pneg %p344
        %p554 = pneg %p368
        %p555 = pneg %p365
        %p556 = pneg %p389
        %p557 = pneg %p386
        %p558 = pneg %p410
        %p559 = pneg %p407
        %p560 = pneg %p436
        %p561 = pneg %p433
        %s562 = sand.u32 %s423, 1
        %s563 = scalar_lea.sflag [#allocation3], %s562
        %s564 = sand.u32 %s423, 1
        %s565 = smul.addr %s564, 8
        %s566 = scalar_lea.vmem [#allocation2], %s565
        %p567 = scmp.lt.s32.totalorder %s32, 1
        %s568 = scalar_select %p567, %s32, 1
        %s569 = smul.addr %s568, 8
        %s570 = scalar_lea.vmem %s0, %s569
        %v572 = vld [vmem:[%s570] sm:$0xff]
        %v573 = vld [vmem:[%s4] sm:$0x1]
        %v574 = vld [vmem:[%s5] sm:$0x1]
        %vm575 = vcmask 261120
        %v576 = vsel %vm575, %v572, 0.0
        %577 = vadd.xlane.f32.xlu0 %v576
        %v578 = vpop.xlane.xlu0 %577
        %v579 = vrcp.pop 32.0
        %v580 = vmul.f32 32.0, %v579
        %v581 = vsub.f32 1.0, %v580
        %v582 = vmul.f32 %v579, %v581
        %v583 = vadd.f32 %v579, %v582
        %vm584 = vweird.f32 %v579
        %v585 = vsel %vm584, %v579, %v583
        %v586 = vmul.f32 %v578, %v585
        %v587 = vsub.f32 %v572, %v586
        %v588 = vmul.f32 %v587, %v587
        %v589 = vsel %vm575, %v588, 0.0
        %590 = vadd.xlane.f32.xlu0 %v589
        %v591 = vpop.xlane.xlu0 %590
        %v592 = vmul.f32 %v591, %v585
        %v593 = vadd.f32 %v592, 1e-05
        %v594 = vrsqrt.pop %v593
        %v595 = vmul.f32 %v594, %v593
        %v596 = vmul.f32 %v595, %v594
        %v597 = vmul.f32 0.5, %v596
        %v598 = vsub.f32 1.5, %v597
        %v599 = vmul.f32 %v594, %v598
        %vm600 = vweird.f32 %v593
        %vm601 = vweird.f32 %v594
        %vm602 = vmor %vm600, %vm601
        %v603 = vsel %vm602, %v594, %v599
        %v604 = vmul.f32 %v587, %v603
        %v606 = vperm.slane %v573, 0
        %v608 = vmul.f32 %v604, %v606
        %v610 = vperm.slane %v574, 0
        %v612 = vadd.f32 %v608, %v610
        %v613 = vpack.c.bf16 %v612, %v612
        %v614 = vld [vmem:[%s1] sm:$0xf]
        %v615 = vld [vmem:[%s1 + $0x4] sm:$0xf]
        %v616 = vld [vmem:[%s1 + $0x8] sm:$0xf]
        %v617 = vld [vmem:[%s1 + $0xc] sm:$0xf]
        %v622 = vunpack.c.l.b16 %v614
        %v623 = vunpack.c.l.b16 %v615
        %v624 = vunpack.c.l.b16 %v616
        %v625 = vunpack.c.l.b16 %v617
        %v626 = vpack.c.b16 %v623, %v622
        %v627 = vpack.c.b16 %v625, %v624
        %v631 = vsel %vm575, %v613, 0
        %633 = vmatpush.bf16.msra.mxu0 0
        %634 = vmatpush.bf16.msra.mxu0 0
        %635 = vmatpush.bf16.msra.mxu0 0
        %636 = vmatpush.bf16.msra.mxu0 0
        %637 = vmatpush.bf16.msra.mxu0 0
        %638 = vmatpush.bf16.msra.mxu0 0
        %639 = vmatpush.bf16.msra.mxu0 %v627
        %640 = vmatpush.bf16.msra.mxu0 %v626
        %641 = vmatmul.bf16.gmra.mxu0 %v631
        %v642 = vpop.f32.mrf.mxu0
        %v643 = vadd.f32 0.0, %v642
        %v644 = vpop.f32.mrf.mxu0
        %645 = vdwg.mxu0
        %v646 = vpack.c.bf16 %v643, %v643
        %648 = vrot.lane.b32.xlu0 %v646, 96
        %v649 = vpop.permute.xlu0 %648
        %vm650 = vcmask 64512
        %v652 = vsel %vm650, %v646, 0
        %v655 = vsel %vm650, %v649, 0
        %657 = vmatpush.bf16.xpose.msra.mxu0 0
        %658 = vmatpush.bf16.xpose.msra.mxu0 0
        %659 = vmatpush.bf16.xpose.msra.mxu0 0
        %660 = vmatpush.bf16.xpose.msra.mxu0 0
        %661 = vmatpush.bf16.xpose.msra.mxu0 0
        %662 = vmatpush.bf16.xpose.msra.mxu0 0
        %663 = vmatpush.bf16.xpose.msra.mxu0 0
        %664 = vmatpush.bf16.xpose.msra.mxu0 %v655
        %665 = vmatmul.bf16.gmra.mxu0 %v652
        %v666 = vpop.f32.mrf.mxu0
        %v667 = vadd.f32 0.0, %v666
        %v668 = vpop.f32.mrf.mxu0
        %669 = vdwg.mxu0
        %v670 = vsel %vm650, %v667, -inf
        %671 = vmax.xlane.f32.xlu0 %v670
        %v672 = vpop.xlane.xlu0 %671
        %v673 = vsub.f32 %v667, %v672
        %v674 = vmul.f32 %v673, 1.442695
        %v675 = vpow.pop %v674
        %v676 = vsel %vm650, %v675, 0.0
        %677 = vadd.xlane.f32.xlu0 %v676
        %v678 = vpop.xlane.xlu0 %677
        %v679 = vrcp.pop %v678
        %v680 = vmul.f32 %v675, %v679
        %v681 = vpack.c.bf16 %v680, %v680
        %682 = vrot.lane.b32.xlu0 %v646, 64
        %v683 = vpop.permute.xlu0 %682
        %v685 = vsel %vm650, %v681, 0
        %vm687 = vcmask 1043456
        %v689 = vsel %vm687, %v683, 0
        %691 = vmatpush.bf16.msra.mxu0 0
        %692 = vmatpush.bf16.msra.mxu0 0
        %693 = vmatpush.bf16.msra.mxu0 0
        %694 = vmatpush.bf16.msra.mxu0 0
        %695 = vmatpush.bf16.msra.mxu0 0
        %696 = vmatpush.bf16.msra.mxu0 0
        %697 = vmatpush.bf16.msra.mxu0 0
        %698 = vmatpush.bf16.msra.mxu0 %v689
        %699 = vmatmul.bf16.gmra.mxu0 %v685
        %v700 = vpop.f32.mrf.mxu0
        %v701 = vadd.f32 0.0, %v700
        %v702 = vpop.f32.mrf.mxu0
        %703 = vdwg.mxu0
        %704 = vrot.lane.b32.xlu0 %v646, 120
        %v705 = vpop.permute.xlu0 %704
        %706 = vrot.lane.b32.xlu0 %v646, 88
        %v707 = vpop.permute.xlu0 %706
        %v709 = vsel %vm650, %v705, 0
        %v712 = vsel %vm650, %v707, 0
        %714 = vmatpush.bf16.xpose.msra.mxu0 0
        %715 = vmatpush.bf16.xpose.msra.mxu0 0
        %716 = vmatpush.bf16.xpose.msra.mxu0 0
        %717 = vmatpush.bf16.xpose.msra.mxu0 0
        %718 = vmatpush.bf16.xpose.msra.mxu0 0
        %719 = vmatpush.bf16.xpose.msra.mxu0 0
        %720 = vmatpush.bf16.xpose.msra.mxu0 0
        %721 = vmatpush.bf16.xpose.msra.mxu0 %v712
        %722 = vmatmul.bf16.gmra.mxu0 %v709
        %v723 = vpop.f32.mrf.mxu0
        %v724 = vadd.f32 0.0, %v723
        %v725 = vpop.f32.mrf.mxu0
        %726 = vdwg.mxu0
        %v727 = vsel %vm650, %v724, -inf
        %728 = vmax.xlane.f32.xlu0 %v727
        %v729 = vpop.xlane.xlu0 %728
        %v730 = vsub.f32 %v724, %v729
        %v731 = vmul.f32 %v730, 1.442695
        %v732 = vpow.pop %v731
        %v733 = vsel %vm650, %v732, 0.0
        %734 = vadd.xlane.f32.xlu0 %v733
        %v735 = vpop.xlane.xlu0 %734
        %v736 = vrcp.pop %v735
        %v737 = vmul.f32 %v732, %v736
        %v738 = vpack.c.bf16 %v737, %v737
        %739 = vrot.lane.b32.xlu0 %v646, 56
        %v740 = vpop.permute.xlu0 %739
        %v742 = vsel %vm650, %v738, 0
        %v745 = vsel %vm687, %v740, 0
        %747 = vmatpush.bf16.msra.mxu0 0
        %748 = vmatpush.bf16.msra.mxu0 0
        %749 = vmatpush.bf16.msra.mxu0 0
        %750 = vmatpush.bf16.msra.mxu0 0
        %751 = vmatpush.bf16.msra.mxu0 0
        %752 = vmatpush.bf16.msra.mxu0 0
        %753 = vmatpush.bf16.msra.mxu0 0
        %754 = vmatpush.bf16.msra.mxu0 %v745
        %755 = vmatmul.bf16.gmra.mxu0 %v742
        %v756 = vpop.f32.mrf.mxu0
        %v757 = vadd.f32 0.0, %v756
        %v758 = vpop.f32.mrf.mxu0
        %759 = vdwg.mxu0
        %760 = vrot.lane.b32.xlu0 %v646, 112
        %v761 = vpop.permute.xlu0 %760
        %762 = vrot.lane.b32.xlu0 %v646, 80
        %v763 = vpop.permute.xlu0 %762
        %v765 = vsel %vm650, %v761, 0
        %v768 = vsel %vm650, %v763, 0
        %770 = vmatpush.bf16.xpose.msra.mxu0 0
        %771 = vmatpush.bf16.xpose.msra.mxu0 0
        %772 = vmatpush.bf16.xpose.msra.mxu0 0
        %773 = vmatpush.bf16.xpose.msra.mxu0 0
        %774 = vmatpush.bf16.xpose.msra.mxu0 0
        %775 = vmatpush.bf16.xpose.msra.mxu0 0
        %776 = vmatpush.bf16.xpose.msra.mxu0 0
        %777 = vmatpush.bf16.xpose.msra.mxu0 %v768
        %778 = vmatmul.bf16.gmra.mxu0 %v765
        %v779 = vpop.f32.mrf.mxu0
        %v780 = vadd.f32 0.0, %v779
        %v781 = vpop.f32.mrf.mxu0
        %782 = vdwg.mxu0
        %v783 = vsel %vm650, %v780, -inf
        %784 = vmax.xlane.f32.xlu0 %v783
        %v785 = vpop.xlane.xlu0 %784
        %v786 = vsub.f32 %v780, %v785
        %v787 = vmul.f32 %v786, 1.442695
        %v788 = vpow.pop %v787
        %v789 = vsel %vm650, %v788, 0.0
        %790 = vadd.xlane.f32.xlu0 %v789
        %v791 = vpop.xlane.xlu0 %790
        %v792 = vrcp.pop %v791
        %v793 = vmul.f32 %v788, %v792
        %v794 = vpack.c.bf16 %v793, %v793
        %795 = vrot.lane.b32.xlu0 %v646, 48
        %v796 = vpop.permute.xlu0 %795
        %v798 = vsel %vm650, %v794, 0
        %v801 = vsel %vm687, %v796, 0
        %803 = vmatpush.bf16.msra.mxu0 0
        %804 = vmatpush.bf16.msra.mxu0 0
        %805 = vmatpush.bf16.msra.mxu0 0
        %806 = vmatpush.bf16.msra.mxu0 0
        %807 = vmatpush.bf16.msra.mxu0 0
        %808 = vmatpush.bf16.msra.mxu0 0
        %809 = vmatpush.bf16.msra.mxu0 0
        %810 = vmatpush.bf16.msra.mxu0 %v801
        %811 = vmatmul.bf16.gmra.mxu0 %v798
        %v812 = vpop.f32.mrf.mxu0
        %v813 = vadd.f32 0.0, %v812
        %v814 = vpop.f32.mrf.mxu0
        %815 = vdwg.mxu0
        %816 = vrot.lane.b32.xlu0 %v646, 104
        %v817 = vpop.permute.xlu0 %816
        %818 = vrot.lane.b32.xlu0 %v646, 72
        %v819 = vpop.permute.xlu0 %818
        %v821 = vsel %vm650, %v817, 0
        %v824 = vsel %vm650, %v819, 0
        %826 = vmatpush.bf16.xpose.msra.mxu0 0
        %827 = vmatpush.bf16.xpose.msra.mxu0 0
        %828 = vmatpush.bf16.xpose.msra.mxu0 0
        %829 = vmatpush.bf16.xpose.msra.mxu0 0
        %830 = vmatpush.bf16.xpose.msra.mxu0 0
        %831 = vmatpush.bf16.xpose.msra.mxu0 0
        %832 = vmatpush.bf16.xpose.msra.mxu0 0
        %833 = vmatpush.bf16.xpose.msra.mxu0 %v824
        %834 = vmatmul.bf16.gmra.mxu0 %v821
        %v835 = vpop.f32.mrf.mxu0
        %v836 = vadd.f32 0.0, %v835
        %v837 = vpop.f32.mrf.mxu0
        %838 = vdwg.mxu0
        %v839 = vsel %vm650, %v836, -inf
        %840 = vmax.xlane.f32.xlu0 %v839
        %v841 = vpop.xlane.xlu0 %840
        %v842 = vsub.f32 %v836, %v841
        %v843 = vmul.f32 %v842, 1.442695
        %v844 = vpow.pop %v843
        %v845 = vsel %vm650, %v844, 0.0
        %846 = vadd.xlane.f32.xlu0 %v845
        %v847 = vpop.xlane.xlu0 %846
        %v848 = vrcp.pop %v847
        %v849 = vmul.f32 %v844, %v848
        %v850 = vpack.c.bf16 %v849, %v849
        %851 = vrot.lane.b32.xlu0 %v646, 40
        %v852 = vpop.permute.xlu0 %851
        %v854 = vsel %vm650, %v850, 0
        %v857 = vsel %vm687, %v852, 0
        %859 = vmatpush.bf16.msra.mxu0 0
        %860 = vmatpush.bf16.msra.mxu0 0
        %861 = vmatpush.bf16.msra.mxu0 0
        %862 = vmatpush.bf16.msra.mxu0 0
        %863 = vmatpush.bf16.msra.mxu0 0
        %864 = vmatpush.bf16.msra.mxu0 0
        %865 = vmatpush.bf16.msra.mxu0 0
        %866 = vmatpush.bf16.msra.mxu0 %v857
        %867 = vmatmul.bf16.gmra.mxu0 %v854
        %v868 = vpop.f32.mrf.mxu0
        %v869 = vadd.f32 0.0, %v868
        %v870 = vpop.f32.mrf.mxu0
        %871 = vdwg.mxu0
        %873 = vrot.lane.b32.xlu0 %v757, 8
        %v874 = vpop.permute.xlu0 %873
        %877 = vrot.lane.b32.xlu0 %v813, 16
        %v878 = vpop.permute.xlu0 %877
        %881 = vrot.lane.b32.xlu0 %v869, 24
        %v882 = vpop.permute.xlu0 %881
        %v884 = vsel %vm650, %v701, %v874
        %vm885 = vcmask 130048
        %v886 = vsel %vm885, %v884, %v878
        %vm887 = vcmask 195584
        %v888 = vsel %vm887, %v886, %v882
        %v889 = vpack.c.bf16 %v888, %v888
        %v890 = vld [vmem:[%s2] sm:$0xf]
        %v891 = vld [vmem:[%s2 + $0x4] sm:$0xf]
        %v892 = vld [vmem:[%s2 + $0x8] sm:$0xf]
        %v893 = vld [vmem:[%s2 + $0xc] sm:$0xf]
        %v894 = vld [vmem:[%s3] sm:$0x1]
        %v896 = vperm.slane %v894, 0
        %v902 = vunpack.c.l.b16 %v890
        %v903 = vunpack.c.l.b16 %v891
        %v904 = vunpack.c.l.b16 %v892
        %v905 = vunpack.c.l.b16 %v893
        %v906 = vpack.c.b16 %v903, %v902
        %v907 = vpack.c.b16 %v905, %v904
        %v911 = vsel %vm575, %v889, 0
        %913 = vmatpush.bf16.msra.mxu0 0
        %914 = vmatpush.bf16.msra.mxu0 0
        %915 = vmatpush.bf16.msra.mxu0 0
        %916 = vmatpush.bf16.msra.mxu0 0
        %917 = vmatpush.bf16.msra.mxu0 0
        %918 = vmatpush.bf16.msra.mxu0 0
        %919 = vmatpush.bf16.msra.mxu0 %v907
        %920 = vmatpush.bf16.msra.mxu0 %v906
        %921 = vmatmul.bf16.gmra.mxu0 %v911
        %v922 = vpop.f32.mrf.mxu0
        %v923 = vadd.f32 %v896, %v922
        %v924 = vpop.f32.mrf.mxu0
        %925 = vdwg.mxu0
        %v926 = vadd.f32 %v572, %v923
        %v927 = vld [vmem:[%s12] sm:$0x1]
        %v928 = vld [vmem:[%s13] sm:$0x1]
        %v929 = vsel %vm575, %v926, 0.0
        %930 = vadd.xlane.f32.xlu0 %v929
        %v931 = vpop.xlane.xlu0 %930
        %v932 = vmul.f32 %v931, %v585
        %v933 = vsub.f32 %v926, %v932
        %v934 = vmul.f32 %v933, %v933
        %v935 = vsel %vm575, %v934, 0.0
        %936 = vadd.xlane.f32.xlu0 %v935
        %v937 = vpop.xlane.xlu0 %936
        %v938 = vmul.f32 %v937, %v585
        %v939 = vadd.f32 %v938, 1e-05
        %v940 = vrsqrt.pop %v939
        %v941 = vmul.f32 %v940, %v939
        %v942 = vmul.f32 %v941, %v940
        %v943 = vmul.f32 0.5, %v942
        %v944 = vsub.f32 1.5, %v943
        %v945 = vmul.f32 %v940, %v944
        %vm946 = vweird.f32 %v939
        %vm947 = vweird.f32 %v940
        %vm948 = vmor %vm946, %vm947
        %v949 = vsel %vm948, %v940, %v945
        %v950 = vmul.f32 %v933, %v949
        %v952 = vperm.slane %v927, 0
        %v954 = vmul.f32 %v950, %v952
        %v956 = vperm.slane %v928, 0
        %v958 = vadd.f32 %v954, %v956
        %v959 = vpack.c.bf16 %v958, %v958
        %v960 = vld [vmem:[%s14] sm:$0xf]
        %v961 = vld [vmem:[%s14 + $0x4] sm:$0xf]
        %v962 = vld [vmem:[%s14 + $0x8] sm:$0xf]
        %v963 = vld [vmem:[%s14 + $0xc] sm:$0xf]
        %v964 = vld [vmem:[%s15] sm:$0x1]
        %v966 = vperm.slane %v964, 0
        %v972 = vunpack.c.l.b16 %v960
        %v973 = vunpack.c.l.b16 %v961
        %v974 = vunpack.c.l.b16 %v962
        %v975 = vunpack.c.l.b16 %v963
        %v976 = vpack.c.b16 %v973, %v972
        %v977 = vpack.c.b16 %v975, %v974
        %v981 = vsel %vm575, %v959, 0
        %983 = vmatpush.bf16.msra.mxu0 0
        %984 = vmatpush.bf16.msra.mxu0 0
        %985 = vmatpush.bf16.msra.mxu0 0
        %986 = vmatpush.bf16.msra.mxu0 0
        %987 = vmatpush.bf16.msra.mxu0 0
        %988 = vmatpush.bf16.msra.mxu0 0
        %989 = vmatpush.bf16.msra.mxu0 %v977
        %990 = vmatpush.bf16.msra.mxu0 %v976
        %991 = vmatmul.bf16.gmra.mxu0 %v981
        %v992 = vpop.f32.mrf.mxu0
        %v993 = vadd.f32 %v966, %v992
        %v994 = vpop.f32.mrf.mxu0
        %995 = vdwg.mxu0
        %v996 = vmax.f32 %v993, 0.0
        %v997 = vpack.c.bf16 %v996, %v996
        %v998 = vld [vmem:[%s16] sm:$0xf]
        %v999 = vld [vmem:[%s16 + $0x4] sm:$0xf]
        %v1000 = vld [vmem:[%s17] sm:$0x1]
        %v1002 = vperm.slane %v1000, 0
        %v1006 = vunpack.c.l.b16 %v998
        %v1007 = vunpack.c.l.b16 %v999
        %v1008 = vpack.c.b16 %v1007, %v1006
        %v1011 = vsel %vm885, %v997, 0
        %1013 = vmatpush.bf16.msra.mxu0 0
        %1014 = vmatpush.bf16.msra.mxu0 0
        %1015 = vmatpush.bf16.msra.mxu0 0
        %1016 = vmatpush.bf16.msra.mxu0 0
        %1017 = vmatpush.bf16.msra.mxu0 0
        %1018 = vmatpush.bf16.msra.mxu0 0
        %1019 = vmatpush.bf16.msra.mxu0 0
        %1020 = vmatpush.bf16.msra.mxu0 %v1008
        %1021 = vmatmul.bf16.gmra.mxu0 %v1011
        %v1022 = vpop.f32.mrf.mxu0
        %v1023 = vadd.f32 %v1002, %v1022
        %v1024 = vpop.f32.mrf.mxu0
        %1025 = vdwg.mxu0
        %v1026 = vld [vmem:[%s10] sm:$0x1]
        %v1027 = vld [vmem:[%s11] sm:$0x1]
        %v1029 = vperm.slane %v1026, 0
        %v1031 = vmul.f32 %v950, %v1029
        %v1033 = vperm.slane %v1027, 0
        %v1035 = vadd.f32 %v1031, %v1033
        %v1036 = vpack.c.bf16 %v1035, %v1035
        %v1037 = vld [vmem:[%s6] sm:$0xf]
        %v1038 = vld [vmem:[%s6 + $0x4] sm:$0xf]
        %v1039 = vld [vmem:[%s6 + $0x8] sm:$0xf]
        %v1040 = vld [vmem:[%s6 + $0xc] sm:$0xf]
        %v1041 = vld [vmem:[%s7] sm:$0x1]
        %v1043 = vperm.slane %v1041, 0
        %v1049 = vunpack.c.l.b16 %v1037
        %v1050 = vunpack.c.l.b16 %v1038
        %v1051 = vunpack.c.l.b16 %v1039
        %v1052 = vunpack.c.l.b16 %v1040
        %v1053 = vpack.c.b16 %v1050, %v1049
        %v1054 = vpack.c.b16 %v1052, %v1051
        %v1058 = vsel %vm575, %v1036, 0
        %1060 = vmatpush.bf16.msra.mxu0 0
        %1061 = vmatpush.bf16.msra.mxu0 0
        %1062 = vmatpush.bf16.msra.mxu0 0
        %1063 = vmatpush.bf16.msra.mxu0 0
        %1064 = vmatpush.bf16.msra.mxu0 0
        %1065 = vmatpush.bf16.msra.mxu0 0
        %1066 = vmatpush.bf16.msra.mxu0 %v1054
        %1067 = vmatpush.bf16.msra.mxu0 %v1053
        %1068 = vmatmul.bf16.gmra.mxu0 %v1058
        %v1069 = vpop.f32.mrf.mxu0
        %v1070 = vadd.f32 %v1043, %v1069
        %v1071 = vpop.f32.mrf.mxu0
        %1072 = vdwg.mxu0
        %v1073 = vmul.f32 %v1070, 0.70710677
        %v1074 = vand.u32 2147483647, %v1073
        %v1075 = vmul.f32 %v1074, 0.3275911
        %v1076 = vadd.f32 %v1075, 1.0
        %v1077 = vrcp.pop %v1076
        %v1078 = vmul.f32 %v1076, %v1077
        %v1079 = vsub.f32 1.0, %v1078
        %v1080 = vmul.f32 %v1077, %v1079
        %v1081 = vadd.f32 %v1077, %v1080
        %vm1082 = vweird.f32 %v1076
        %vm1083 = vweird.f32 %v1077
        %vm1084 = vmor %vm1082, %vm1083
        %v1085 = vsel %vm1084, %v1077, %v1081
        %v1086 = vand.u32 2147483647, %v1076
        %vm1087 = vcmp.eq.f32.partialorder %v1086, 8.507059e+37
        %v1088 = vand.u32 %v1076, 2147483648
        %v1089 = vor.u32 1.1754944e-38, %v1088
        %v1090 = vsel %vm1087, %v1089, %v1085
        %v1091 = vmul.f32 1.0, %v1090
        %v1092 = vmul.f32 %v1091, 1.0614054
        %v1093 = vadd.f32 %v1092, -1.4531521
        %v1094 = vmul.f32 %v1091, %v1093
        %v1095 = vadd.f32 %v1094, 1.4214138
        %v1096 = vmul.f32 %v1091, %v1095
        %v1097 = vadd.f32 %v1096, -0.28449672
        %v1098 = vmul.f32 %v1091, %v1097
        %v1099 = vadd.f32 %v1098, 0.2548296
        %v1100 = vmul.f32 %v1091, %v1099
        %v1101 = vsub.f32 0.0, %v1074
        %v1102 = vmul.f32 %v1101, %v1074
        %v1103 = vmul.f32 %v1102, 1.442695
        %v1104 = vpow.pop %v1103
        %v1105 = vmul.f32 %v1100, %v1104
        %v1106 = vsub.f32 1.0, %v1105
        %vm1107 = vcmp.ge.f32.partialorder %v1073, 0.0
        %v1108 = vsub.f32 0.0, %v1106
        %v1109 = vsel %vm1107, %v1106, %v1108
        %v1110 = vmul.f32 %v1070, 0.5
        %v1111 = vadd.f32 %v1109, 1.0
        %v1112 = vmul.f32 %v1110, %v1111
        %v1113 = vpack.c.bf16 %v1112, %v1112
        %v1114 = vld [vmem:[%s8] sm:$0xf]
        %v1115 = vld [vmem:[%s8 + $0x4] sm:$0xf]
        %v1116 = vld [vmem:[%s8 + $0x8] sm:$0xf]
        %v1117 = vld [vmem:[%s8 + $0xc] sm:$0xf]
        %v1118 = vld [vmem:[%s8 + $0x10] sm:$0xf]
        %v1119 = vld [vmem:[%s8 + $0x14] sm:$0xf]
        %v1120 = vld [vmem:[%s8 + $0x18] sm:$0xf]
        %v1121 = vld [vmem:[%s8 + $0x1c] sm:$0xf]
        %v1122 = vld [vmem:[%s8 + $0x20] sm:$0xf]
        %v1123 = vld [vmem:[%s8 + $0x24] sm:$0xf]
        %v1124 = vld [vmem:[%s8 + $0x28] sm:$0xf]
        %v1125 = vld [vmem:[%s8 + $0x2c] sm:$0xf]
        %v1126 = vld [vmem:[%s8 + $0x30] sm:$0xf]
        %v1127 = vld [vmem:[%s8 + $0x34] sm:$0xf]
        %v1128 = vld [vmem:[%s8 + $0x38] sm:$0xf]
        %v1129 = vld [vmem:[%s8 + $0x3c] sm:$0xf]
        %v1130 = vld [vmem:[%s9] sm:$0x1]
        %v1132 = vperm.slane %v1130, 0
        %v1150 = vunpack.c.l.b16 %v1114
        %v1151 = vunpack.c.l.b16 %v1115
        %v1152 = vunpack.c.l.b16 %v1116
        %v1153 = vunpack.c.l.b16 %v1117
        %v1154 = vunpack.c.l.b16 %v1118
        %v1155 = vunpack.c.l.b16 %v1119
        %v1156 = vunpack.c.l.b16 %v1120
        %v1157 = vunpack.c.l.b16 %v1121
        %v1158 = vunpack.c.l.b16 %v1122
        %v1159 = vunpack.c.l.b16 %v1123
        %v1160 = vunpack.c.l.b16 %v1124
        %v1161 = vunpack.c.l.b16 %v1125
        %v1162 = vunpack.c.l.b16 %v1126
        %v1163 = vunpack.c.l.b16 %v1127
        %v1164 = vunpack.c.l.b16 %v1128
        %v1165 = vunpack.c.l.b16 %v1129
        %v1166 = vpack.c.b16 %v1151, %v1150
        %v1167 = vpack.c.b16 %v1153, %v1152
        %v1168 = vpack.c.b16 %v1155, %v1154
        %v1169 = vpack.c.b16 %v1157, %v1156
        %v1170 = vpack.c.b16 %v1159, %v1158
        %v1171 = vpack.c.b16 %v1161, %v1160
        %v1172 = vpack.c.b16 %v1163, %v1162
        %v1173 = vpack.c.b16 %v1165, %v1164
        %1182 = vmatpush.bf16.msra.mxu0 %v1173
        %1183 = vmatpush.bf16.msra.mxu0 %v1172
        %1184 = vmatpush.bf16.msra.mxu0 %v1171
        %1185 = vmatpush.bf16.msra.mxu0 %v1170
        %1186 = vmatpush.bf16.msra.mxu0 %v1169
        %1187 = vmatpush.bf16.msra.mxu0 %v1168
        %1188 = vmatpush.bf16.msra.mxu0 %v1167
        %1189 = vmatpush.bf16.msra.mxu0 %v1166
        %1190 = vmatmul.bf16.gmra.mxu0 %v1113
        %v1191 = vpop.f32.mrf.mxu0
        %v1192 = vadd.f32 %v1132, %v1191
        %v1193 = vpop.f32.mrf.mxu0
        %1194 = vdwg.mxu0
        %v1195 = vadd.f32 %v926, %v1192
        %v1196 = vadd.f32 %v1195, %v1023
        %1197 = vst.msk [vmem:[%s566] sm:$0xff] %vm575, %v1196
        %s1198 = sand.u32 %s423, 1
        %s1199 = scalar_lea.sflag [#allocation3], %s1198
        %s1200 = sand.u32 %s423, 1
        %s1201 = smul.addr %s1200, 8
        %s1202 = scalar_lea.vmem [#allocation2], %s1201
        // Predicated region
        $region93: #{tpu_custom_call.1} parent=91 // pred_check
          %p1203 = pneg %p433
        $region94: #{tpu_custom_call.1} parent=91 // pred_check_branch
          %1205 = sbr.rel (%p1203) target = $region96
        $region95: #{tpu_custom_call.1} parent=91 // pred_region
          %1207 = vsyncadd %s1199, 0
          %s1208 = smul.addr %s32, 8
          %s1209 = scalar_lea.hbm %s18, %s1208
          %s1211 = sshll.u32 %s1202, 4
          %s1212 = int_to_ptr.vmem [resolvable:$true] %s1211
          %s1213 = sshll.u32 %s1209, 4
          %s1214 = int_to_ptr.hbm [resolvable:$true] %s1213
          %1216 = dma.vmem_to_hbm [thread:$0]  %s1212, 128, %s1214, %s1199
        $region96: #{tpu_custom_call.1} parent=91 // pred_fallthru
          _
      $region92: #{tpu_custom_call.1} parent=5 // pred_fallthru
        _
      %p1217 = scmp.le.s32.totalorder 2, %s27
      // Predicated region
      $region97: #{tpu_custom_call.1} parent=5 // pred_check
        %p1218 = pneg %p1217
      $region98: #{tpu_custom_call.1} parent=5 // pred_check_branch
        %1220 = sbr.rel (%p1218) target = $region100
      $region99: #{tpu_custom_call.1} parent=5 // pred_region
        %s1221 = ssub.s32 %s27, 2
        // Predicated region
        $region101: #{tpu_custom_call.1} parent=99 // pred_check
          %p1222 = pneg %p439
        $region102: #{tpu_custom_call.1} parent=99 // pred_check_branch
          %1224 = sbr.rel (%p1222) target = $region104
        $region103: #{tpu_custom_call.1} parent=99 // pred_region
          %s1225 = sand.u32 %s424, 1
          %s1226 = scalar_lea.sflag [#allocation3], %s1225
          %s1227 = sand.u32 %s424, 1
          %s1228 = smul.addr %s1227, 8
          %s1229 = scalar_lea.vmem [#allocation2], %s1228
          %1231 = dma.done %s1226, 128
        $region104: #{tpu_custom_call.1} parent=99 // pred_fallthru
          _
      $region100: #{tpu_custom_call.1} parent=5 // pred_fallthru
        _
    $region6: #{tpu_custom_call.1} parent=1 // loop_footer
      %s31 = sadd.s32 1, %s27
    $region7: #{tpu_custom_call.1} parent=1 // loop_footer_branch
      %26 = sbr.rel target = $region3
    $region8: #{tpu_custom_call.1} parent=1 // loop_exit
      _
    %1232 = vsyncpa [#allocation3], 1
    %s1233 = scalar_lea.sflag [#allocation3], 1
    %1234 = vsyncpa %s1233, 1

</llo_original>
